<compile_context>
chip_gen: v7x
topology: tpu7x:2x2x1
jax: 0.10.0
libtpu: 0.0.40
codegen_flags: <defaults>
</compile_context>

<pallas_src>
import functools

import jax
import jax.numpy as jnp
import numpy as np
from jax import lax
from jax.experimental import pallas as pl
from jax.experimental.pallas import tpu as pltpu

D_IN, HID, C_OUT = 8, 32, 16          # input dim, hidden width ("width"), output heads
T_TRAJ, B_TRAJ, N_RAND = 4, 8, 8      # trajectory length, per-step batch, query batch
N_TASKS = 4                           # meta-batch of independent tasks (grid dimension)

# Parameter-slab row offsets (8-row aligned so prologue slices are tile friendly).
P_W1, P_B1, P_W2, P_B2, P_W3, P_B3, P_ETA, P_ROWS = 0, 8, 16, 48, 56, 88, 89, 96


# -----------------------------------------------------------------------------------------
# Fused kernel: whole MetaLearnerRegression inner loop for ONE task (one grid step).
#   data slab : T segments of [query rows ; trajectory-step-k rows], features
#               [x (D_IN) | target (1) | class index (1)].
#   prologue  : frozen layers evaluated once over the whole slab; one hoisted transpose.
#   per state : one merged [Nq+B,HID]@[HID,C] dot per fast-weight state; query loss +
#               getOjaUpdate on the plastic output layer.
# -----------------------------------------------------------------------------------------
def _meta_kernel(hebbian, T, B, Nq, data_ref, param_ref, loss_ref, w3_out_ref):
    f32 = jnp.float32
    S = Nq + B                      # rows per segment
    R = T * S

    # ---- unpack the shared parameter slab (one resident DMA for all slow weights) ------
    w1 = param_ref[P_W1:P_W1 + D_IN, :]
    b1 = param_ref[P_B1:P_B1 + 1, :]
    w2 = param_ref[P_W2:P_W2 + HID, :]
    b2 = param_ref[P_B2:P_B2 + 1, :]
    w3 = param_ref[P_W3:P_W3 + HID, 0:C_OUT]
    b3 = param_ref[P_B3:P_B3 + 1, 0:C_OUT]
    eta = jnp.broadcast_to(param_ref[P_ETA:P_ETA + 1, 0:1], (HID, C_OUT))  # hoisted bcast

    # ---- unpack the per-task data slab --------------------------------------------------
    data = data_ref[...]                                    # (R, D_IN + 2)
    x_all = data[:, 0:D_IN]
    tgt_all = data[:, D_IN:D_IN + 1]
    idx_all = data[:, D_IN + 1:D_IN + 2].astype(jnp.int32)

    # ---- prologue: frozen layers once over every row ever used --------------------------
    h1 = jnp.maximum(jnp.dot(x_all, w1, preferred_element_type=f32) + b1, 0.0)
    h2 = jnp.maximum(jnp.dot(h1, w2, preferred_element_type=f32) + b2, 0.0)   # (R, HID)
    h2t = h2.T                                   # single hoisted transpose (HID, R)
    onehot = (lax.broadcasted_iota(jnp.int32, (R, C_OUT), 1) == idx_all).astype(f32)
    row_q = lax.broadcasted_iota(jnp.int32, (Nq, 1), 0)
    inv_b = f32(1.0 / B)

    def query_loss(sel_q, tgt_q, nq):
        # F.mse_loss over the first nq query rows (nq static -> mask + 1/nq constant).
        d = (sel_q - tgt_q) * (row_q < nq).astype(f32)
        return jnp.sum(d * d, keepdims=True) * f32(1.0 / nq)          # (1, 1)

    fast_w3 = w3                                 # plastic layer; vreg/VMEM-resident carry
    for k in range(T):                           # T tiny & static -> fully unrolled
        lo = k * S
        # One merged plastic-layer matmul per weight state w_k: query + step-k traj rows.
        logits = jnp.dot(h2[lo:lo + S, :], fast_w3, preferred_element_type=f32) + b3
        sel = jnp.sum(logits * onehot[lo:lo + S, :], axis=1, keepdims=True)   # (S, 1)

        # losses_q[k] uses the CURRENT weights w_k:
        #   k == 0 : slow weights, full query batch (the torch.no_grad block)
        #   k == 1 : fast weights after step 0, full query batch
        #   k >= 2 : fast weights after step k-1, first int(k*Nq/T) query rows
        nq = Nq if k <= 1 else int(k * Nq / T)
        loss_ref[:, k:k + 1] = query_loss(sel[0:Nq, :], tgt_all[lo:lo + Nq, :], nq)

        # getOjaUpdate on the plastic output layer (error routed to the selected unit).
        # TODO(synk): inner F.mse_loss on the trajectory logits only feeds the omitted
        #             meta-backward pass, so its value is not materialized here.
        post = (tgt_all[lo + Nq:lo + S, :] - sel[Nq:S, :]) * onehot[lo + Nq:lo + S, :]
        delta = jnp.dot(h2t[:, lo + Nq:lo + S], post, preferred_element_type=f32) * inv_b
        if not hebbian:                          # Oja stabilisation term
            delta = delta - fast_w3 * (jnp.sum(post * post, axis=0, keepdims=True) * inv_b)
        fast_w3 = fast_w3 + eta * delta

    # losses_q[T]: final fast weights over the full query batch (query activations are
    # identical in every segment, so segment 0's rows are reused -> one extra dot).
    logits_q = jnp.dot(h2[0:Nq, :], fast_w3, preferred_element_type=f32) + b3
    sel_q = jnp.sum(logits_q * onehot[0:Nq, :], axis=1, keepdims=True)
    loss_ref[:, T:T + 1] = query_loss(sel_q, tgt_all[0:Nq, :], Nq)

    w3_out_ref[...] = fast_w3


def _pack_params(params, plasticity):
    """Pack all slow weights + the plasticity scalar into one [P_ROWS, HID] f32 slab."""
    w1, b1, w2, b2, w3, b3 = params
    slab = jnp.zeros((P_ROWS, HID), jnp.float32)
    slab = slab.at[P_W1:P_W1 + D_IN, :].set(w1)
    slab = slab.at[P_B1:P_B1 + 1, :].set(b1.reshape(1, HID))
    slab = slab.at[P_W2:P_W2 + HID, :].set(w2)
    slab = slab.at[P_B2:P_B2 + 1, :].set(b2.reshape(1, HID))
    slab = slab.at[P_W3:P_W3 + HID, 0:C_OUT].set(w3)
    slab = slab.at[P_B3:P_B3 + 1, 0:C_OUT].set(b3.reshape(1, C_OUT))
    slab = slab.at[P_ETA, 0].set(jnp.asarray(plasticity, jnp.float32).reshape(()))
    return slab


# -----------------------------------------------------------------------------------------
# Task-batched MetaLearnerRegression.forward (inner loop only) -- one pallas_call.
#   x_traj [N,T,B,D], y_traj [N,T,B,2], x_rand [N,1,Nq,D], y_rand [N,1,Nq,2]
#   returns (losses_q [N,T+1], fast_w3 [N,HID,C_OUT])
# -----------------------------------------------------------------------------------------
@functools.partial(jax.jit, static_argnames=("hebb",))
def meta_forward_batch(x_traj, y_traj, x_rand, y_rand, params, plasticity, hebb=True):
    N, T, B, _ = x_traj.shape
    Nq = x_rand.shape[2]
    R = T * (Nq + B)

    # Pack per-task data into ONE slab: T segments of [query ; trajectory-step-k] rows with
    # features [x | target | class-index]. Query rows are duplicated per segment (tiny) so
    # every per-step plastic matmul reads one contiguous [Nq+B, HID] window.
    xq = jnp.broadcast_to(x_rand[:, 0][:, None], (N, T, Nq, D_IN))
    yq = jnp.broadcast_to(y_rand[:, 0][:, None], (N, T, Nq, 2))
    x_seg = jnp.concatenate([xq, x_traj], axis=2)                 # [N,T,Nq+B,D]
    y_seg = jnp.concatenate([yq, y_traj], axis=2)                 # [N,T,Nq+B,2]
    data = jnp.concatenate([x_seg, y_seg], axis=3).astype(jnp.float32)
    data = data.reshape(N, R, D_IN + 2)

    pslab = _pack_params(params, plasticity)                      # one shared param DMA

    losses, fast_w3 = pl.pallas_call(
        functools.partial(_meta_kernel, hebb, T, B, Nq),
        out_shape=(jax.ShapeDtypeStruct((N, 1, T + 1), jnp.float32),
                   jax.ShapeDtypeStruct((N, HID, C_OUT), jnp.float32)),
        grid_spec=pltpu.PrefetchScalarGridSpec(
            num_scalar_prefetch=0,
            grid=(N,),                                            # one grid step per task
            in_specs=[pl.BlockSpec((None, R, D_IN + 2), lambda t: (t, 0, 0)),
                      pl.BlockSpec((P_ROWS, HID), lambda t: (0, 0))],   # resident params
            out_specs=(pl.BlockSpec((None, 1, T + 1), lambda t: (t, 0, 0)),
                       pl.BlockSpec((None, HID, C_OUT), lambda t: (t, 0, 0)))),
        compiler_params=pltpu.CompilerParams(
            dimension_semantics=("parallel",),                    # shard tasks across TCs
            vmem_limit_bytes=8 * 1024 * 1024),
    )(data, pslab)
    return losses.reshape(N, T + 1), fast_w3


def meta_forward(x_traj, y_traj, x_rand, y_rand, params, plasticity, hebb=True):
    """Single-task wrapper with the original forward() signature/shapes."""
    losses, fast_w3 = meta_forward_batch(x_traj[None], y_traj[None], x_rand[None],
                                         y_rand[None], params, plasticity, hebb=hebb)
    return losses[0], fast_w3[0]


def init_params(key):
    ks = jax.random.split(key, 3)
    w1 = jax.random.normal(ks[0], (D_IN, HID), jnp.float32) / jnp.sqrt(D_IN)
    b1 = jnp.zeros((1, HID), jnp.float32)
    w2 = jax.random.normal(ks[1], (HID, HID), jnp.float32) / jnp.sqrt(HID)
    b2 = jnp.zeros((1, HID), jnp.float32)
    w3 = jax.random.normal(ks[2], (HID, C_OUT), jnp.float32) / jnp.sqrt(HID)
    b3 = jnp.zeros((1, C_OUT), jnp.float32)
    return (w1, b1, w2, b2, w3, b3)


# ---------------- pure-JAX single-task reference mirroring the PyTorch loop --------------
def meta_forward_ref(x_traj, y_traj, x_rand, y_rand, params, eta, hebb=True):
    w1, b1, w2, b2, w3, b3 = params
    T, Nq = x_traj.shape[0], x_rand.shape[1]
    hi = lax.Precision.HIGHEST

    def front(x):
        h1 = jnp.maximum(jnp.dot(x, w1, precision=hi) + b1, 0.0)
        return jnp.maximum(jnp.dot(h1, w2, precision=hi) + b2, 0.0)

    def select(h2, w, idx):
        logits = jnp.dot(h2, w, precision=hi) + b3
        return jnp.take_along_axis(logits, idx[:, None], axis=1)

    def oja(h2, sel, tgt, idx, w):
        onehot = jax.nn.one_hot(idx, C_OUT, dtype=jnp.float32)
        post = (tgt - sel) * onehot
        d = jnp.dot(h2.T, post, precision=hi) / h2.shape[0]
        if not hebb:
            d = d - w * (jnp.sum(post * post, axis=0, keepdims=True) / h2.shape[0])
        return w + eta * d

    xq, tq = x_rand[0], y_rand[0, :, 0:1]
    iq = y_rand[0, :, 1].astype(jnp.int32)
    h2q = front(xq)
    losses = []

    fast = w3
    h2 = front(x_traj[0])
    i0 = y_traj[0, :, 1].astype(jnp.int32)
    sel = select(h2, fast, i0)
    losses.append(jnp.mean((select(h2q, w3, iq) - tq) ** 2))          # losses_q[0]
    fast = oja(h2, sel, y_traj[0, :, 0:1], i0, fast)
    losses.append(jnp.mean((select(h2q, fast, iq) - tq) ** 2))        # losses_q[1]
    for k in range(1, T):
        h2 = front(x_traj[k])
        ik = y_traj[k, :, 1].astype(jnp.int32)
        sel = select(h2, fast, ik)
        fast = oja(h2, sel, y_traj[k, :, 0:1], ik, fast)
        nq = int((k + 1) * Nq / T)
        losses.append(jnp.mean((select(h2q[:nq], fast, iq[:nq]) - tq[:nq]) ** 2))
    return jnp.stack(losses), fast


if __name__ == "__main__":
    root = jax.random.PRNGKey(0)
    kp, kt, kv, ki, kq, kqv, kqi = jax.random.split(root, 7)

    params = init_params(kp)
    plasticity = jnp.array([0.1], jnp.float32)       # args.init_plasticity

    x_traj = jax.random.normal(kt, (N_TASKS, T_TRAJ, B_TRAJ, D_IN), jnp.float32)
    y_val = jax.random.normal(kv, (N_TASKS, T_TRAJ, B_TRAJ), jnp.float32)
    y_idx = jax.random.randint(ki, (N_TASKS, T_TRAJ, B_TRAJ), 0, C_OUT).astype(jnp.float32)
    y_traj = jnp.stack([y_val, y_idx], axis=-1)                      # [N,T,B,2]

    x_rand = jax.random.normal(kq, (N_TASKS, 1, N_RAND, D_IN), jnp.float32)
    yq_val = jax.random.normal(kqv, (N_TASKS, 1, N_RAND), jnp.float32)
    yq_idx = jax.random.randint(kqi, (N_TASKS, 1, N_RAND), 0, C_OUT).astype(jnp.float32)
    y_rand = jnp.stack([yq_val, yq_idx], axis=-1)                    # [N,1,Nq,2]

    for hebb in (True, False):                       # Hebbian and Oja-stabilised variants
        losses, fast_w3 = meta_forward_batch(x_traj, y_traj, x_rand, y_rand,
                                             params, plasticity, hebb=hebb)
        jax.block_until_ready((losses, fast_w3))

        ref_l, ref_w = [], []
        for n in range(N_TASKS):
            l, w = meta_forward_ref(x_traj[n], y_traj[n], x_rand[n], y_rand[n],
                                    params, float(plasticity[0]), hebb=hebb)
            ref_l.append(l)
            ref_w.append(w)
        np.testing.assert_allclose(np.asarray(losses), np.asarray(jnp.stack(ref_l)),
                                   rtol=2e-2, atol=2e-2)
        np.testing.assert_allclose(np.asarray(fast_w3), np.asarray(jnp.stack(ref_w)),
                                   rtol=2e-2, atol=2e-2)

    print("KERNEL_OK")
</pallas_src>

<mosaic_0001>
module attributes {stable_mosaic.version = 11 : i64} {
  func.func @_meta_kernel(%arg0: i32, %arg1: memref<1x64x10xf32, #tpu.memory_space<vmem>>, %arg2: memref<96x32xf32, #tpu.memory_space<vmem>>, %arg3: memref<1x1x5xf32, #tpu.memory_space<vmem>>, %arg4: memref<1x32x16xf32, #tpu.memory_space<vmem>>) attributes {dimension_semantics = [#tpu.dimension_semantics<parallel>], iteration_bounds = array<i64: 4>, scalar_prefetch = 0 : i64, scratch_operands = 0 : i64, tpu.core_type = #tpu.core_type<tc>, window_params = [{transform_indices = @transform_0, window_bounds = array<i64: 1, 64, 10>}, {pipeline_mode = #tpu.pipeline_mode<synchronous>, transform_indices = @transform_1, window_bounds = array<i64: 96, 32>}, {transform_indices = @transform_2, window_bounds = array<i64: 1, 1, 5>}, {transform_indices = @transform_3, window_bounds = array<i64: 1, 32, 16>}]} {
    %c0 = arith.constant 0 : index
    %c0_0 = arith.constant 0 : index
    %0 = vector.load %arg2[%c0, %c0_0] : memref<96x32xf32, #tpu.memory_space<vmem>>, vector<8x32xf32>
    %c8 = arith.constant 8 : index
    %c0_1 = arith.constant 0 : index
    %1 = vector.load %arg2[%c8, %c0_1] : memref<96x32xf32, #tpu.memory_space<vmem>>, vector<1x32xf32>
    %c16 = arith.constant 16 : index
    %c0_2 = arith.constant 0 : index
    %2 = vector.load %arg2[%c16, %c0_2] : memref<96x32xf32, #tpu.memory_space<vmem>>, vector<32x32xf32>
    %c48 = arith.constant 48 : index
    %c0_3 = arith.constant 0 : index
    %3 = vector.load %arg2[%c48, %c0_3] : memref<96x32xf32, #tpu.memory_space<vmem>>, vector<1x32xf32>
    %c56 = arith.constant 56 : index
    %c0_4 = arith.constant 0 : index
    %4 = vector.load %arg2[%c56, %c0_4] : memref<96x32xf32, #tpu.memory_space<vmem>>, vector<32x16xf32>
    %c88 = arith.constant 88 : index
    %c0_5 = arith.constant 0 : index
    %5 = vector.load %arg2[%c88, %c0_5] : memref<96x32xf32, #tpu.memory_space<vmem>>, vector<1x16xf32>
    %c89 = arith.constant 89 : index
    %c0_6 = arith.constant 0 : index
    %6 = vector.load %arg2[%c89, %c0_6] : memref<96x32xf32, #tpu.memory_space<vmem>>, vector<1x1xf32>
    %7 = vector.shape_cast %6 : vector<1x1xf32> to vector<1x1xf32>
    %8 = vector.broadcast %7 : vector<1x1xf32> to vector<32x16xf32>
    %c0_7 = arith.constant 0 : index
    %c0_8 = arith.constant 0 : index
    %c0_9 = arith.constant 0 : index
    %9 = vector.load %arg1[%c0_7, %c0_8, %c0_9] : memref<1x64x10xf32, #tpu.memory_space<vmem>>, vector<1x64x10xf32>
    %10 = vector.shape_cast %9 : vector<1x64x10xf32> to vector<64x10xf32>
    %11 = vector.extract_strided_slice %10 {offsets = [0, 0], sizes = [64, 8], strides = [1, 1]} : vector<64x10xf32> to vector<64x8xf32>
    %12 = vector.extract_strided_slice %10 {offsets = [0, 8], sizes = [64, 1], strides = [1, 1]} : vector<64x10xf32> to vector<64x1xf32>
    %13 = vector.extract_strided_slice %10 {offsets = [0, 9], sizes = [64, 1], strides = [1, 1]} : vector<64x10xf32> to vector<64x1xf32>
    %14 = arith.fptosi %13 : vector<64x1xf32> to vector<64x1xi32>
    %cst = arith.constant dense<0.000000e+00> : vector<64x32xf32>
    %15 = tpu.matmul %11, %0, %cst {dimension_numbers = #tpu.dot_dimension_numbers<[1], [0], [0], [1], [0, 0, 1, 1], [], []>} : vector<64x8xf32>, vector<8x32xf32>, vector<64x32xf32> -> vector<64x32xf32>
    %16 = vector.broadcast %1 : vector<1x32xf32> to vector<64x32xf32>
    %17 = arith.addf %15, %16 : vector<64x32xf32>
    %cst_10 = arith.constant 0.000000e+00 : f32
    %18 = vector.broadcast %cst_10 : f32 to vector<64x32xf32>
    %19 = arith.maximumf %17, %18 : vector<64x32xf32>
    %cst_11 = arith.constant dense<0.000000e+00> : vector<64x32xf32>
    %20 = tpu.matmul %19, %2, %cst_11 {dimension_numbers = #tpu.dot_dimension_numbers<[1], [0], [0], [1], [0, 0, 1, 1], [], []>} : vector<64x32xf32>, vector<32x32xf32>, vector<64x32xf32> -> vector<64x32xf32>
    %21 = vector.broadcast %3 : vector<1x32xf32> to vector<64x32xf32>
    %22 = arith.addf %20, %21 : vector<64x32xf32>
    %cst_12 = arith.constant 0.000000e+00 : f32
    %23 = vector.broadcast %cst_12 : f32 to vector<64x32xf32>
    %24 = arith.maximumf %22, %23 : vector<64x32xf32>
    %25 = tpu.transpose %24, [1, 0] : vector<64x32xf32> -> vector<32x64xf32>
    %26 = tpu.iota {dimensions = array<i32: 1>} : vector<64x16xi32>
    %27 = vector.broadcast %14 : vector<64x1xi32> to vector<64x16xi32>
    %28 = arith.cmpi eq, %26, %27 : vector<64x16xi32>
    %29 = arith.extui %28 : vector<64x16xi1> to vector<64x16xi32>
    %30 = arith.sitofp %29 : vector<64x16xi32> to vector<64x16xf32>
    %31 = tpu.iota {dimensions = array<i32: 0>} : vector<8x1xi32>
    %32 = vector.extract_strided_slice %24 {offsets = [0, 0], sizes = [16, 32], strides = [1, 1]} : vector<64x32xf32> to vector<16x32xf32>
    %cst_13 = arith.constant dense<0.000000e+00> : vector<16x16xf32>
    %33 = tpu.matmul %32, %4, %cst_13 {dimension_numbers = #tpu.dot_dimension_numbers<[1], [0], [0], [1], [0, 0, 1, 1], [], []>} : vector<16x32xf32>, vector<32x16xf32>, vector<16x16xf32> -> vector<16x16xf32>
    %34 = vector.broadcast %5 : vector<1x16xf32> to vector<16x16xf32>
    %35 = arith.addf %33, %34 : vector<16x16xf32>
    %36 = vector.extract_strided_slice %30 {offsets = [0, 0], sizes = [16, 16], strides = [1, 1]} : vector<64x16xf32> to vector<16x16xf32>
    %37 = arith.mulf %35, %36 : vector<16x16xf32>
    %cst_14 = arith.constant dense<0.000000e+00> : vector<16xf32>
    %38 = vector.multi_reduction <add>, %37, %cst_14 [1] : vector<16x16xf32> to vector<16xf32>
    %39 = vector.shape_cast %38 : vector<16xf32> to vector<16x1xf32>
    %40 = vector.extract_strided_slice %39 {offsets = [0, 0], sizes = [8, 1], strides = [1, 1]} : vector<16x1xf32> to vector<8x1xf32>
    %41 = vector.extract_strided_slice %12 {offsets = [0, 0], sizes = [8, 1], strides = [1, 1]} : vector<64x1xf32> to vector<8x1xf32>
    %42 = arith.subf %40, %41 : vector<8x1xf32>
    %c8_i32 = arith.constant 8 : i32
    %43 = vector.broadcast %c8_i32 : i32 to vector<8x1xi32>
    %44 = arith.cmpi slt, %31, %43 : vector<8x1xi32>
    %45 = arith.extui %44 : vector<8x1xi1> to vector<8x1xi32>
    %46 = arith.sitofp %45 : vector<8x1xi32> to vector<8x1xf32>
    %47 = arith.mulf %42, %46 : vector<8x1xf32>
    %48 = arith.mulf %47, %47 : vector<8x1xf32>
    %49 = vector.shape_cast %48 : vector<8x1xf32> to vector<1x8x1xf32>
    %cst_15 = arith.constant dense<0.000000e+00> : vector<1xf32>
    %50 = vector.multi_reduction <add>, %49, %cst_15 [1, 2] : vector<1x8x1xf32> to vector<1xf32>
    %51 = vector.shape_cast %50 : vector<1xf32> to vector<1x1x1xf32>
    %52 = vector.extract %51[0, 0, 0] : f32 from vector<1x1x1xf32>
    %53 = vector.broadcast %52 : f32 to vector<1x1xf32>
    %cst_16 = arith.constant 1.250000e-01 : f32
    %54 = vector.broadcast %cst_16 : f32 to vector<1x1xf32>
    %55 = arith.mulf %53, %54 : vector<1x1xf32>
    %c0_17 = arith.constant 0 : index
    %c0_18 = arith.constant 0 : index
    %c0_19 = arith.constant 0 : index
    %56 = vector.load %arg3[%c0_17, %c0_18, %c0_19] : memref<1x1x5xf32, #tpu.memory_space<vmem>>, vector<1x1x1xf32>
    %57 = vector.shape_cast %56 : vector<1x1x1xf32> to vector<1x1xf32>
    %58 = vector.shape_cast %55 : vector<1x1xf32> to vector<1x1x1xf32>
    tpu.vector_store %arg3[%c0_17, %c0_18, %c0_19], %58 {strides = array<i32>} : memref<1x1x5xf32, #tpu.memory_space<vmem>>, vector<1x1x1xf32>,
    %59 = vector.extract_strided_slice %12 {offsets = [8, 0], sizes = [8, 1], strides = [1, 1]} : vector<64x1xf32> to vector<8x1xf32>
    %60 = vector.extract_strided_slice %39 {offsets = [8, 0], sizes = [8, 1], strides = [1, 1]} : vector<16x1xf32> to vector<8x1xf32>
    %61 = arith.subf %59, %60 : vector<8x1xf32>
    %62 = vector.extract_strided_slice %30 {offsets = [8, 0], sizes = [8, 16], strides = [1, 1]} : vector<64x16xf32> to vector<8x16xf32>
    %63 = vector.broadcast %61 : vector<8x1xf32> to vector<8x16xf32>
    %64 = arith.mulf %63, %62 : vector<8x16xf32>
    %65 = vector.extract_strided_slice %25 {offsets = [0, 8], sizes = [32, 8], strides = [1, 1]} : vector<32x64xf32> to vector<32x8xf32>
    %cst_20 = arith.constant dense<0.000000e+00> : vector<32x16xf32>
    %66 = tpu.matmul %65, %64, %cst_20 {dimension_numbers = #tpu.dot_dimension_numbers<[1], [0], [0], [1], [0, 0, 1, 1], [], []>} : vector<32x8xf32>, vector<8x16xf32>, vector<32x16xf32> -> vector<32x16xf32>
    %cst_21 = arith.constant 1.250000e-01 : f32
    %67 = vector.broadcast %cst_21 : f32 to vector<32x16xf32>
    %68 = arith.mulf %66, %67 : vector<32x16xf32>
    %69 = arith.mulf %8, %68 : vector<32x16xf32>
    %70 = arith.addf %4, %69 : vector<32x16xf32>
    %71 = vector.extract_strided_slice %24 {offsets = [16, 0], sizes = [16, 32], strides = [1, 1]} : vector<64x32xf32> to vector<16x32xf32>
    %cst_22 = arith.constant dense<0.000000e+00> : vector<16x16xf32>
    %72 = tpu.matmul %71, %70, %cst_22 {dimension_numbers = #tpu.dot_dimension_numbers<[1], [0], [0], [1], [0, 0, 1, 1], [], []>} : vector<16x32xf32>, vector<32x16xf32>, vector<16x16xf32> -> vector<16x16xf32>
    %73 = vector.broadcast %5 : vector<1x16xf32> to vector<16x16xf32>
    %74 = arith.addf %72, %73 : vector<16x16xf32>
    %75 = vector.extract_strided_slice %30 {offsets = [16, 0], sizes = [16, 16], strides = [1, 1]} : vector<64x16xf32> to vector<16x16xf32>
    %76 = arith.mulf %74, %75 : vector<16x16xf32>
    %cst_23 = arith.constant dense<0.000000e+00> : vector<16xf32>
    %77 = vector.multi_reduction <add>, %76, %cst_23 [1] : vector<16x16xf32> to vector<16xf32>
    %78 = vector.shape_cast %77 : vector<16xf32> to vector<16x1xf32>
    %79 = vector.extract_strided_slice %78 {offsets = [0, 0], sizes = [8, 1], strides = [1, 1]} : vector<16x1xf32> to vector<8x1xf32>
    %80 = vector.extract_strided_slice %12 {offsets = [16, 0], sizes = [8, 1], strides = [1, 1]} : vector<64x1xf32> to vector<8x1xf32>
    %81 = arith.subf %79, %80 : vector<8x1xf32>
    %c8_i32_24 = arith.constant 8 : i32
    %82 = vector.broadcast %c8_i32_24 : i32 to vector<8x1xi32>
    %83 = arith.cmpi slt, %31, %82 : vector<8x1xi32>
    %84 = arith.extui %83 : vector<8x1xi1> to vector<8x1xi32>
    %85 = arith.sitofp %84 : vector<8x1xi32> to vector<8x1xf32>
    %86 = arith.mulf %81, %85 : vector<8x1xf32>
    %87 = arith.mulf %86, %86 : vector<8x1xf32>
    %88 = vector.shape_cast %87 : vector<8x1xf32> to vector<1x8x1xf32>
    %cst_25 = arith.constant dense<0.000000e+00> : vector<1xf32>
    %89 = vector.multi_reduction <add>, %88, %cst_25 [1, 2] : vector<1x8x1xf32> to vector<1xf32>
    %90 = vector.shape_cast %89 : vector<1xf32> to vector<1x1x1xf32>
    %91 = vector.extract %90[0, 0, 0] : f32 from vector<1x1x1xf32>
    %92 = vector.broadcast %91 : f32 to vector<1x1xf32>
    %cst_26 = arith.constant 1.250000e-01 : f32
    %93 = vector.broadcast %cst_26 : f32 to vector<1x1xf32>
    %94 = arith.mulf %92, %93 : vector<1x1xf32>
    %c0_27 = arith.constant 0 : index
    %c0_28 = arith.constant 0 : index
    %c1 = arith.constant 1 : index
    %95 = vector.load %arg3[%c0_27, %c0_28, %c1] : memref<1x1x5xf32, #tpu.memory_space<vmem>>, vector<1x1x1xf32>
    %96 = vector.shape_cast %95 : vector<1x1x1xf32> to vector<1x1xf32>
    %97 = vector.shape_cast %94 : vector<1x1xf32> to vector<1x1x1xf32>
    tpu.vector_store %arg3[%c0_27, %c0_28, %c1], %97 {strides = array<i32>} : memref<1x1x5xf32, #tpu.memory_space<vmem>>, vector<1x1x1xf32>,
    %98 = vector.extract_strided_slice %12 {offsets = [24, 0], sizes = [8, 1], strides = [1, 1]} : vector<64x1xf32> to vector<8x1xf32>
    %99 = vector.extract_strided_slice %78 {offsets = [8, 0], sizes = [8, 1], strides = [1, 1]} : vector<16x1xf32> to vector<8x1xf32>
    %100 = arith.subf %98, %99 : vector<8x1xf32>
    %101 = vector.extract_strided_slice %30 {offsets = [24, 0], sizes = [8, 16], strides = [1, 1]} : vector<64x16xf32> to vector<8x16xf32>
    %102 = vector.broadcast %100 : vector<8x1xf32> to vector<8x16xf32>
    %103 = arith.mulf %102, %101 : vector<8x16xf32>
    %104 = vector.extract_strided_slice %25 {offsets = [0, 24], sizes = [32, 8], strides = [1, 1]} : vector<32x64xf32> to vector<32x8xf32>
    %cst_29 = arith.constant dense<0.000000e+00> : vector<32x16xf32>
    %105 = tpu.matmul %104, %103, %cst_29 {dimension_numbers = #tpu.dot_dimension_numbers<[1], [0], [0], [1], [0, 0, 1, 1], [], []>} : vector<32x8xf32>, vector<8x16xf32>, vector<32x16xf32> -> vector<32x16xf32>
    %cst_30 = arith.constant 1.250000e-01 : f32
    %106 = vector.broadcast %cst_30 : f32 to vector<32x16xf32>
    %107 = arith.mulf %105, %106 : vector<32x16xf32>
    %108 = arith.mulf %8, %107 : vector<32x16xf32>
    %109 = arith.addf %70, %108 : vector<32x16xf32>
    %110 = vector.extract_strided_slice %24 {offsets = [32, 0], sizes = [16, 32], strides = [1, 1]} : vector<64x32xf32> to vector<16x32xf32>
    %cst_31 = arith.constant dense<0.000000e+00> : vector<16x16xf32>
    %111 = tpu.matmul %110, %109, %cst_31 {dimension_numbers = #tpu.dot_dimension_numbers<[1], [0], [0], [1], [0, 0, 1, 1], [], []>} : vector<16x32xf32>, vector<32x16xf32>, vector<16x16xf32> -> vector<16x16xf32>
    %112 = vector.broadcast %5 : vector<1x16xf32> to vector<16x16xf32>
    %113 = arith.addf %111, %112 : vector<16x16xf32>
    %114 = vector.extract_strided_slice %30 {offsets = [32, 0], sizes = [16, 16], strides = [1, 1]} : vector<64x16xf32> to vector<16x16xf32>
    %115 = arith.mulf %113, %114 : vector<16x16xf32>
    %cst_32 = arith.constant dense<0.000000e+00> : vector<16xf32>
    %116 = vector.multi_reduction <add>, %115, %cst_32 [1] : vector<16x16xf32> to vector<16xf32>
    %117 = vector.shape_cast %116 : vector<16xf32> to vector<16x1xf32>
    %118 = vector.extract_strided_slice %117 {offsets = [0, 0], sizes = [8, 1], strides = [1, 1]} : vector<16x1xf32> to vector<8x1xf32>
    %119 = vector.extract_strided_slice %12 {offsets = [32, 0], sizes = [8, 1], strides = [1, 1]} : vector<64x1xf32> to vector<8x1xf32>
    %120 = arith.subf %118, %119 : vector<8x1xf32>
    %c4_i32 = arith.constant 4 : i32
    %121 = vector.broadcast %c4_i32 : i32 to vector<8x1xi32>
    %122 = arith.cmpi slt, %31, %121 : vector<8x1xi32>
    %123 = arith.extui %122 : vector<8x1xi1> to vector<8x1xi32>
    %124 = arith.sitofp %123 : vector<8x1xi32> to vector<8x1xf32>
    %125 = arith.mulf %120, %124 : vector<8x1xf32>
    %126 = arith.mulf %125, %125 : vector<8x1xf32>
    %127 = vector.shape_cast %126 : vector<8x1xf32> to vector<1x8x1xf32>
    %cst_33 = arith.constant dense<0.000000e+00> : vector<1xf32>
    %128 = vector.multi_reduction <add>, %127, %cst_33 [1, 2] : vector<1x8x1xf32> to vector<1xf32>
    %129 = vector.shape_cast %128 : vector<1xf32> to vector<1x1x1xf32>
    %130 = vector.extract %129[0, 0, 0] : f32 from vector<1x1x1xf32>
    %131 = vector.broadcast %130 : f32 to vector<1x1xf32>
    %cst_34 = arith.constant 2.500000e-01 : f32
    %132 = vector.broadcast %cst_34 : f32 to vector<1x1xf32>
    %133 = arith.mulf %131, %132 : vector<1x1xf32>
    %c0_35 = arith.constant 0 : index
    %c0_36 = arith.constant 0 : index
    %c2 = arith.constant 2 : index
    %134 = vector.load %arg3[%c0_35, %c0_36, %c2] : memref<1x1x5xf32, #tpu.memory_space<vmem>>, vector<1x1x1xf32>
    %135 = vector.shape_cast %134 : vector<1x1x1xf32> to vector<1x1xf32>
    %136 = vector.shape_cast %133 : vector<1x1xf32> to vector<1x1x1xf32>
    tpu.vector_store %arg3[%c0_35, %c0_36, %c2], %136 {strides = array<i32>} : memref<1x1x5xf32, #tpu.memory_space<vmem>>, vector<1x1x1xf32>,
    %137 = vector.extract_strided_slice %12 {offsets = [40, 0], sizes = [8, 1], strides = [1, 1]} : vector<64x1xf32> to vector<8x1xf32>
    %138 = vector.extract_strided_slice %117 {offsets = [8, 0], sizes = [8, 1], strides = [1, 1]} : vector<16x1xf32> to vector<8x1xf32>
    %139 = arith.subf %137, %138 : vector<8x1xf32>
    %140 = vector.extract_strided_slice %30 {offsets = [40, 0], sizes = [8, 16], strides = [1, 1]} : vector<64x16xf32> to vector<8x16xf32>
    %141 = vector.broadcast %139 : vector<8x1xf32> to vector<8x16xf32>
    %142 = arith.mulf %141, %140 : vector<8x16xf32>
    %143 = vector.extract_strided_slice %25 {offsets = [0, 40], sizes = [32, 8], strides = [1, 1]} : vector<32x64xf32> to vector<32x8xf32>
    %cst_37 = arith.constant dense<0.000000e+00> : vector<32x16xf32>
    %144 = tpu.matmul %143, %142, %cst_37 {dimension_numbers = #tpu.dot_dimension_numbers<[1], [0], [0], [1], [0, 0, 1, 1], [], []>} : vector<32x8xf32>, vector<8x16xf32>, vector<32x16xf32> -> vector<32x16xf32>
    %cst_38 = arith.constant 1.250000e-01 : f32
    %145 = vector.broadcast %cst_38 : f32 to vector<32x16xf32>
    %146 = arith.mulf %144, %145 : vector<32x16xf32>
    %147 = arith.mulf %8, %146 : vector<32x16xf32>
    %148 = arith.addf %109, %147 : vector<32x16xf32>
    %149 = vector.extract_strided_slice %24 {offsets = [48, 0], sizes = [16, 32], strides = [1, 1]} : vector<64x32xf32> to vector<16x32xf32>
    %cst_39 = arith.constant dense<0.000000e+00> : vector<16x16xf32>
    %150 = tpu.matmul %149, %148, %cst_39 {dimension_numbers = #tpu.dot_dimension_numbers<[1], [0], [0], [1], [0, 0, 1, 1], [], []>} : vector<16x32xf32>, vector<32x16xf32>, vector<16x16xf32> -> vector<16x16xf32>
    %151 = vector.broadcast %5 : vector<1x16xf32> to vector<16x16xf32>
    %152 = arith.addf %150, %151 : vector<16x16xf32>
    %153 = vector.extract_strided_slice %30 {offsets = [48, 0], sizes = [16, 16], strides = [1, 1]} : vector<64x16xf32> to vector<16x16xf32>
    %154 = arith.mulf %152, %153 : vector<16x16xf32>
    %cst_40 = arith.constant dense<0.000000e+00> : vector<16xf32>
    %155 = vector.multi_reduction <add>, %154, %cst_40 [1] : vector<16x16xf32> to vector<16xf32>
    %156 = vector.shape_cast %155 : vector<16xf32> to vector<16x1xf32>
    %157 = vector.extract_strided_slice %156 {offsets = [0, 0], sizes = [8, 1], strides = [1, 1]} : vector<16x1xf32> to vector<8x1xf32>
    %158 = vector.extract_strided_slice %12 {offsets = [48, 0], sizes = [8, 1], strides = [1, 1]} : vector<64x1xf32> to vector<8x1xf32>
    %159 = arith.subf %157, %158 : vector<8x1xf32>
    %c6_i32 = arith.constant 6 : i32
    %160 = vector.broadcast %c6_i32 : i32 to vector<8x1xi32>
    %161 = arith.cmpi slt, %31, %160 : vector<8x1xi32>
    %162 = arith.extui %161 : vector<8x1xi1> to vector<8x1xi32>
    %163 = arith.sitofp %162 : vector<8x1xi32> to vector<8x1xf32>
    %164 = arith.mulf %159, %163 : vector<8x1xf32>
    %165 = arith.mulf %164, %164 : vector<8x1xf32>
    %166 = vector.shape_cast %165 : vector<8x1xf32> to vector<1x8x1xf32>
    %cst_41 = arith.constant dense<0.000000e+00> : vector<1xf32>
    %167 = vector.multi_reduction <add>, %166, %cst_41 [1, 2] : vector<1x8x1xf32> to vector<1xf32>
    %168 = vector.shape_cast %167 : vector<1xf32> to vector<1x1x1xf32>
    %169 = vector.extract %168[0, 0, 0] : f32 from vector<1x1x1xf32>
    %170 = vector.broadcast %169 : f32 to vector<1x1xf32>
    %cst_42 = arith.constant 0.166666672 : f32
    %171 = vector.broadcast %cst_42 : f32 to vector<1x1xf32>
    %172 = arith.mulf %170, %171 : vector<1x1xf32>
    %c0_43 = arith.constant 0 : index
    %c0_44 = arith.constant 0 : index
    %c3 = arith.constant 3 : index
    %173 = vector.load %arg3[%c0_43, %c0_44, %c3] : memref<1x1x5xf32, #tpu.memory_space<vmem>>, vector<1x1x1xf32>
    %174 = vector.shape_cast %173 : vector<1x1x1xf32> to vector<1x1xf32>
    %175 = vector.shape_cast %172 : vector<1x1xf32> to vector<1x1x1xf32>
    tpu.vector_store %arg3[%c0_43, %c0_44, %c3], %175 {strides = array<i32>} : memref<1x1x5xf32, #tpu.memory_space<vmem>>, vector<1x1x1xf32>,
    %176 = vector.extract_strided_slice %12 {offsets = [56, 0], sizes = [8, 1], strides = [1, 1]} : vector<64x1xf32> to vector<8x1xf32>
    %177 = vector.extract_strided_slice %156 {offsets = [8, 0], sizes = [8, 1], strides = [1, 1]} : vector<16x1xf32> to vector<8x1xf32>
    %178 = arith.subf %176, %177 : vector<8x1xf32>
    %179 = vector.extract_strided_slice %30 {offsets = [56, 0], sizes = [8, 16], strides = [1, 1]} : vector<64x16xf32> to vector<8x16xf32>
    %180 = vector.broadcast %178 : vector<8x1xf32> to vector<8x16xf32>
    %181 = arith.mulf %180, %179 : vector<8x16xf32>
    %182 = vector.extract_strided_slice %25 {offsets = [0, 56], sizes = [32, 8], strides = [1, 1]} : vector<32x64xf32> to vector<32x8xf32>
    %cst_45 = arith.constant dense<0.000000e+00> : vector<32x16xf32>
    %183 = tpu.matmul %182, %181, %cst_45 {dimension_numbers = #tpu.dot_dimension_numbers<[1], [0], [0], [1], [0, 0, 1, 1], [], []>} : vector<32x8xf32>, vector<8x16xf32>, vector<32x16xf32> -> vector<32x16xf32>
    %cst_46 = arith.constant 1.250000e-01 : f32
    %184 = vector.broadcast %cst_46 : f32 to vector<32x16xf32>
    %185 = arith.mulf %183, %184 : vector<32x16xf32>
    %186 = arith.mulf %8, %185 : vector<32x16xf32>
    %187 = arith.addf %148, %186 : vector<32x16xf32>
    %188 = vector.extract_strided_slice %24 {offsets = [0, 0], sizes = [8, 32], strides = [1, 1]} : vector<64x32xf32> to vector<8x32xf32>
    %cst_47 = arith.constant dense<0.000000e+00> : vector<8x16xf32>
    %189 = tpu.matmul %188, %187, %cst_47 {dimension_numbers = #tpu.dot_dimension_numbers<[1], [0], [0], [1], [0, 0, 1, 1], [], []>} : vector<8x32xf32>, vector<32x16xf32>, vector<8x16xf32> -> vector<8x16xf32>
    %190 = vector.broadcast %5 : vector<1x16xf32> to vector<8x16xf32>
    %191 = arith.addf %189, %190 : vector<8x16xf32>
    %192 = vector.extract_strided_slice %30 {offsets = [0, 0], sizes = [8, 16], strides = [1, 1]} : vector<64x16xf32> to vector<8x16xf32>
    %193 = arith.mulf %191, %192 : vector<8x16xf32>
    %cst_48 = arith.constant dense<0.000000e+00> : vector<8xf32>
    %194 = vector.multi_reduction <add>, %193, %cst_48 [1] : vector<8x16xf32> to vector<8xf32>
    %195 = vector.shape_cast %194 : vector<8xf32> to vector<8x1xf32>
    %196 = vector.extract_strided_slice %12 {offsets = [0, 0], sizes = [8, 1], strides = [1, 1]} : vector<64x1xf32> to vector<8x1xf32>
    %197 = arith.subf %195, %196 : vector<8x1xf32>
    %c8_i32_49 = arith.constant 8 : i32
    %198 = vector.broadcast %c8_i32_49 : i32 to vector<8x1xi32>
    %199 = arith.cmpi slt, %31, %198 : vector<8x1xi32>
    %200 = arith.extui %199 : vector<8x1xi1> to vector<8x1xi32>
    %201 = arith.sitofp %200 : vector<8x1xi32> to vector<8x1xf32>
    %202 = arith.mulf %197, %201 : vector<8x1xf32>
    %203 = arith.mulf %202, %202 : vector<8x1xf32>
    %204 = vector.shape_cast %203 : vector<8x1xf32> to vector<1x8x1xf32>
    %cst_50 = arith.constant dense<0.000000e+00> : vector<1xf32>
    %205 = vector.multi_reduction <add>, %204, %cst_50 [1, 2] : vector<1x8x1xf32> to vector<1xf32>
    %206 = vector.shape_cast %205 : vector<1xf32> to vector<1x1x1xf32>
    %207 = vector.extract %206[0, 0, 0] : f32 from vector<1x1x1xf32>
    %208 = vector.broadcast %207 : f32 to vector<1x1xf32>
    %cst_51 = arith.constant 1.250000e-01 : f32
    %209 = vector.broadcast %cst_51 : f32 to vector<1x1xf32>
    %210 = arith.mulf %208, %209 : vector<1x1xf32>
    %c0_52 = arith.constant 0 : index
    %c0_53 = arith.constant 0 : index
    %c4 = arith.constant 4 : index
    %211 = vector.load %arg3[%c0_52, %c0_53, %c4] : memref<1x1x5xf32, #tpu.memory_space<vmem>>, vector<1x1x1xf32>
    %212 = vector.shape_cast %211 : vector<1x1x1xf32> to vector<1x1xf32>
    %213 = vector.shape_cast %210 : vector<1x1xf32> to vector<1x1x1xf32>
    tpu.vector_store %arg3[%c0_52, %c0_53, %c4], %213 {strides = array<i32>} : memref<1x1x5xf32, #tpu.memory_space<vmem>>, vector<1x1x1xf32>,
    %c0_54 = arith.constant 0 : index
    %c0_55 = arith.constant 0 : index
    %c0_56 = arith.constant 0 : index
    %214 = vector.load %arg4[%c0_54, %c0_55, %c0_56] : memref<1x32x16xf32, #tpu.memory_space<vmem>>, vector<1x32x16xf32>
    %215 = vector.shape_cast %214 : vector<1x32x16xf32> to vector<32x16xf32>
    %216 = vector.shape_cast %187 : vector<32x16xf32> to vector<1x32x16xf32>
    tpu.vector_store %arg4[%c0_54, %c0_55, %c0_56], %216 {strides = array<i32>} : memref<1x32x16xf32, #tpu.memory_space<vmem>>, vector<1x32x16xf32>,
    return
  }
  func.func @transform_0(%arg0: i32) -> (i32, i32, i32) {
    %c0_i32 = arith.constant 0 : i32
    %c0_i32_0 = arith.constant 0 : i32
    %c0_i32_1 = arith.constant 0 : i32
    return %arg0, %c0_i32, %c0_i32_0 : i32, i32, i32
  }
  func.func @transform_1(%arg0: i32) -> (i32, i32) {
    %c0_i32 = arith.constant 0 : i32
    %c0_i32_0 = arith.constant 0 : i32
    %c0_i32_1 = arith.constant 0 : i32
    return %c0_i32, %c0_i32_0 : i32, i32
  }
  func.func @transform_2(%arg0: i32) -> (i32, i32, i32) {
    %c0_i32 = arith.constant 0 : i32
    %c0_i32_0 = arith.constant 0 : i32
    %c0_i32_1 = arith.constant 0 : i32
    return %arg0, %c0_i32, %c0_i32_0 : i32, i32, i32
  }
  func.func @transform_3(%arg0: i32) -> (i32, i32, i32) {
    %c0_i32 = arith.constant 0 : i32
    %c0_i32_0 = arith.constant 0 : i32
    %c0_i32_1 = arith.constant 0 : i32
    return %arg0, %c0_i32, %c0_i32_0 : i32, i32, i32
  }
}

</mosaic_0001>

<llo_original>
// kernel: meta_forward_batch.1
$region0: #{meta_forward_batch.1}
  #allocation0 [shape = 'u32[]', space=smem, size = 0x4, offset = 0x4, fixed_abs, tag = 'smem constant byte address 0x4 - core index']
  #allocation1 [shape = 'u32[144,128]{1,0:T(1,128)}', space=vmem, size = 0x12000, scoped, tag = 'internal scratch']
  %s0 = inlined_call_operand.vmem [shape: f32[4,64,10], index: 0, kind: input, shape index: {}]
  %s1 = inlined_call_operand.vmem [shape: f32[96,32], index: 1, kind: input, shape index: {}]
  %s2 = inlined_call_operand.hbm [shape: f32[4,1,5], index: 2, kind: output, shape index: {0}]
  %s3 = inlined_call_operand.vmem [shape: f32[4,32,16], index: 3, kind: output, shape index: {1}]
  %4 = xla_tuple %s2, %s3
  %s5 = sld [smem:[#allocation0]]
  $region49: #{meta_forward_batch.1} parent=0
    _
  %s7 = ssub.s32 1, %s5
  %s8 = scalar_select 0, %s7, %s5
  $region1: #{meta_forward_batch.1} parent=0
    #allocation2 [shape = 'u8[1024]{0}', space=vmem, size = 0x400, scoped, tag = 'output window, operand 0']
    #allocation3 [shape = 's32[2]{0}', space=sflag, size = 0x8, scoped, tag = 'scoped memory for meta_forward_batch.1']
    %9 = vsyncpa [#allocation3], 0
    %s10 = scalar_lea.sflag [#allocation3], 1
    %11 = vsyncpa %s10, 0
    loop: start=0, step=1, limit=6
    $region2: #{meta_forward_batch.1} parent=1 // loop_pre_header
      _
    $region3: #{meta_forward_batch.1} parent=1 // loop_header
      %s13 = sphi 0, %s17
      %p14 = scmp.ge.s32.totalorder %s13, 6
      %s23 = sphi 0, %s25
      %s26 = sphi 0, %s23
      %s27 = sphi 0, %s26
      %s43 = sphi 0, %s27
      %s47 = sphi 0, %s47
      %s49 = sphi 0, %s47
      %s50 = sphi 0, %s49
      %s64 = sphi 0, %s50
      %s70 = sphi 0, %s72
      %s73 = sphi 0, %s70
      %s74 = sphi 0, %s73
      %s90 = sphi 0, %s74
      %s96 = sphi 0, %s98
      %s99 = sphi 0, %s96
      %s100 = sphi 0, %s99
      %s116 = sphi 0, %s100
    $region4: #{meta_forward_batch.1} parent=1 // loop_header_branch
      %16 = sbr.rel (%p14) target = $region8
    $region5: #{meta_forward_batch.1} parent=1 // loop_body
      %s18 = ssub.s32 %s13, 1
      %s19 = ssub.s32 %s13, 2
      %s20 = sadd.s32 %s13, 1
      %s21 = ssub.s32 %s13, %s20
      %p22 = scmp.eq.s32.totalorder %s21, 0
      %s24 = sadd.s32 %s23, 1
      %s25 = scalar_select %p22, %s23, %s24
      %p28 = pneg %p22
      %p29 = scmp.eq.s32.totalorder %s13, 3
      %p30 = por %p28, %p29
      %p31 = scmp.ne.s32.totalorder %s23, %s26
      %p32 = scmp.eq.s32.totalorder %s13, 0
      %p33 = por %p31, %p32
      %p34 = scmp.ne.s32.totalorder %s23, %s26
      %p35 = scmp.eq.s32.totalorder %s18, 3
      %p36 = por %p34, %p35
      %p37 = scmp.ne.s32.totalorder %s26, %s27
      %p38 = scmp.eq.s32.totalorder %s18, 0
      %p39 = por %p37, %p38
      %p40 = scmp.ne.s32.totalorder %s26, %s27
      %p41 = scmp.eq.s32.totalorder %s19, 3
      %p42 = por %p40, %p41
      %p44 = scmp.ne.s32.totalorder %s27, %s43
      %p45 = scmp.eq.s32.totalorder %s19, 0
      %p46 = por %p44, %p45
      %s48 = sadd.s32 %s47, 1
      %p51 = scmp.eq.s32.totalorder %s13, 3
      %p52 = scmp.ne.s32.totalorder %s47, %s49
      %p53 = scmp.eq.s32.totalorder %s13, 0
      %p54 = por %p52, %p53
      %p55 = scmp.ne.s32.totalorder %s47, %s49
      %p56 = scmp.eq.s32.totalorder %s18, 3
      %p57 = por %p55, %p56
      %p58 = scmp.ne.s32.totalorder %s49, %s50
      %p59 = scmp.eq.s32.totalorder %s18, 0
      %p60 = por %p58, %p59
      %p61 = scmp.ne.s32.totalorder %s49, %s50
      %p62 = scmp.eq.s32.totalorder %s19, 3
      %p63 = por %p61, %p62
      %p65 = scmp.ne.s32.totalorder %s50, %s64
      %p66 = scmp.eq.s32.totalorder %s19, 0
      %p67 = por %p65, %p66
      %s68 = ssub.s32 %s13, %s20
      %p69 = scmp.eq.s32.totalorder %s68, 0
      %s71 = sadd.s32 %s70, 1
      %s72 = scalar_select %p69, %s70, %s71
      %p75 = pneg %p69
      %p76 = scmp.eq.s32.totalorder %s13, 3
      %p77 = por %p75, %p76
      %p78 = scmp.ne.s32.totalorder %s70, %s73
      %p79 = scmp.eq.s32.totalorder %s13, 0
      %p80 = por %p78, %p79
      %p81 = scmp.ne.s32.totalorder %s70, %s73
      %p82 = scmp.eq.s32.totalorder %s18, 3
      %p83 = por %p81, %p82
      %p84 = scmp.ne.s32.totalorder %s73, %s74
      %p85 = scmp.eq.s32.totalorder %s18, 0
      %p86 = por %p84, %p85
      %p87 = scmp.ne.s32.totalorder %s73, %s74
      %p88 = scmp.eq.s32.totalorder %s19, 3
      %p89 = por %p87, %p88
      %p91 = scmp.ne.s32.totalorder %s74, %s90
      %p92 = scmp.eq.s32.totalorder %s19, 0
      %p93 = por %p91, %p92
      %s94 = ssub.s32 %s13, %s20
      %p95 = scmp.eq.s32.totalorder %s94, 0
      %s97 = sadd.s32 %s96, 1
      %s98 = scalar_select %p95, %s96, %s97
      %p101 = pneg %p95
      %p102 = scmp.eq.s32.totalorder %s13, 3
      %p103 = por %p101, %p102
      %p104 = scmp.ne.s32.totalorder %s96, %s99
      %p105 = scmp.eq.s32.totalorder %s13, 0
      %p106 = por %p104, %p105
      %p107 = scmp.ne.s32.totalorder %s96, %s99
      %p108 = scmp.eq.s32.totalorder %s18, 3
      %p109 = por %p107, %p108
      %p110 = scmp.ne.s32.totalorder %s99, %s100
      %p111 = scmp.eq.s32.totalorder %s18, 0
      %p112 = por %p110, %p111
      %p113 = scmp.ne.s32.totalorder %s99, %s100
      %p114 = scmp.eq.s32.totalorder %s19, 3
      %p115 = por %p113, %p114
      %p117 = scmp.ne.s32.totalorder %s100, %s116
      %p118 = scmp.eq.s32.totalorder %s19, 0
      %p119 = por %p117, %p118
      %p120 = scmp.le.s32.totalorder 1, %s13
      %p121 = scmp.lt.s32.totalorder %s13, 5
      %p122 = pnand %p120, %p121
      %p123 = pneg %p122
      // Predicated region
      $region9: #{meta_forward_batch.1} parent=5 // pred_check
        _
      $region10: #{meta_forward_batch.1} parent=5 // pred_check_branch
        %125 = sbr.rel (%p122) target = $region12
      $region11: #{meta_forward_batch.1} parent=5 // pred_region
        %s126 = ssub.s32 %s13, 1
        // Predicated region
        $region13: #{meta_forward_batch.1} parent=11 // pred_check
          %p127 = pneg %p60
        $region14: #{meta_forward_batch.1} parent=11 // pred_check_branch
          %129 = sbr.rel (%p127) target = $region16
        $region15: #{meta_forward_batch.1} parent=11 // pred_region
          _
        $region16: #{meta_forward_batch.1} parent=11 // pred_fallthru
          _
      $region12: #{meta_forward_batch.1} parent=5 // pred_fallthru
        _
      %p130 = scmp.lt.s32.totalorder %s13, 4
      // Predicated region
      $region17: #{meta_forward_batch.1} parent=5 // pred_check
        %p131 = pneg %p130
      $region18: #{meta_forward_batch.1} parent=5 // pred_check_branch
        %133 = sbr.rel (%p131) target = $region20
      $region19: #{meta_forward_batch.1} parent=5 // pred_region
        // Predicated region
        $region21: #{meta_forward_batch.1} parent=19 // pred_check
          %p134 = pneg %p33
        $region22: #{meta_forward_batch.1} parent=19 // pred_check_branch
          %136 = sbr.rel (%p134) target = $region24
        $region23: #{meta_forward_batch.1} parent=19 // pred_region
          %p137 = scmp.lt.s32.totalorder %s13, 3
          %s138 = scalar_select %p137, %s13, 3
          %s139 = smul.addr %s138, 8
          %s140 = smul.addr %s139, 8
          %s141 = scalar_lea.vmem %s0, %s140
        $region24: #{meta_forward_batch.1} parent=19 // pred_fallthru
          _
      $region20: #{meta_forward_batch.1} parent=5 // pred_fallthru
        _
      %p142 = scmp.le.s32.totalorder 1, %s13
      %p143 = scmp.lt.s32.totalorder %s13, 5
      %p144 = pnand %p142, %p143
      %p145 = pneg %p144
      // Predicated region
      $region25: #{meta_forward_batch.1} parent=5 // pred_check
        _
      $region26: #{meta_forward_batch.1} parent=5 // pred_check_branch
        %147 = sbr.rel (%p144) target = $region28
      $region27: #{meta_forward_batch.1} parent=5 // pred_region
        %s148 = ssub.s32 %s13, 1
        %p149 = scmp.lt.s32.totalorder %s18, 3
        %s150 = scalar_select %p149, %s18, 3
        %s151 = smul.addr %s150, 8
        %s152 = smul.addr %s151, 8
        %s153 = scalar_lea.vmem %s0, %s152
        %p154 = pneg %p39
        %p155 = pneg %p36
        %p156 = pneg %p60
        %p157 = pneg %p57
        %p158 = pneg %p86
        %p159 = pneg %p83
        %s160 = sand.u32 %s73, 1
        %s161 = scalar_lea.sflag [#allocation3], %s160
        %s162 = sand.u32 %s73, 1
        %s163 = scalar_lea.vmem [#allocation2], %s162
        %p164 = pneg %p112
        %p165 = pneg %p109
        %p166 = scmp.lt.s32.totalorder %s18, 3
        %s167 = scalar_select %p166, %s18, 3
        %s168 = smul.addr %s167, 4
        %s169 = smul.addr %s168, 8
        %s170 = scalar_lea.vmem %s3, %s169
        %p171 = scmp.lt.s32.totalorder %s18, 3
        %s172 = scalar_select %p171, %s18, 3
        %s173 = smul.addr %s172, 8
        %s174 = smul.addr %s173, 8
        %s175 = scalar_lea.vmem %s0, %s174
        %p176 = scmp.lt.s32.totalorder %s18, 3
        %s177 = scalar_select %p176, %s18, 3
        %s178 = smul.addr %s177, 4
        %s179 = smul.addr %s178, 8
        %s180 = scalar_lea.vmem %s3, %s179
        %v181 = vld [vmem:[%s1] sm:$0xff]
        %v182 = vld [vmem:[%s1 + $0x8] sm:$0x1]
        %v183 = vld [vmem:[%s1 + $0x10] sm:$0xff]
        %v184 = vld [vmem:[%s1 + $0x18] sm:$0xff]
        %v185 = vld [vmem:[%s1 + $0x20] sm:$0xff]
        %v186 = vld [vmem:[%s1 + $0x28] sm:$0xff]
        %v187 = vld [vmem:[%s1 + $0x30] sm:$0x1]
        %v188 = vld [vmem:[%s1 + $0x38] sm:$0xff]
        %v189 = vld [vmem:[%s1 + $0x40] sm:$0xff]
        %v190 = vld [vmem:[%s1 + $0x48] sm:$0xff]
        %v191 = vld [vmem:[%s1 + $0x50] sm:$0xff]
        %v192 = vld [vmem:[%s1 + $0x58] sm:$0x1]
        %v193 = vld [vmem:[%s1 + $0x59] sm:$0x1]
        %s195 = vtos %v193
        %v196 = vstv %s195
        %v198 = vld [vmem:[%s175] sm:$0xff]
        %v199 = vld [vmem:[%s175 + $0x8] sm:$0xff]
        %v200 = vld [vmem:[%s175 + $0x10] sm:$0xff]
        %v201 = vld [vmem:[%s175 + $0x18] sm:$0xff]
        %v202 = vld [vmem:[%s175 + $0x20] sm:$0xff]
        %v203 = vld [vmem:[%s175 + $0x28] sm:$0xff]
        %v204 = vld [vmem:[%s175 + $0x30] sm:$0xff]
        %v205 = vld [vmem:[%s175 + $0x38] sm:$0xff]
        %v206 = vcvt.f32.s32.to.zero.pseudo %v198
        %v207 = vcvt.f32.s32.to.zero.pseudo %v199
        %v208 = vcvt.f32.s32.to.zero.pseudo %v200
        %v209 = vcvt.f32.s32.to.zero.pseudo %v201
        %v210 = vcvt.f32.s32.to.zero.pseudo %v202
        %v211 = vcvt.f32.s32.to.zero.pseudo %v203
        %v212 = vcvt.f32.s32.to.zero.pseudo %v204
        %v213 = vcvt.f32.s32.to.zero.pseudo %v205
        %v214 = vlaneseq
        %v215 = vshrl.u32 %v214, 7
        %v216 = vsub.s32 0, %v215
        %v217 = vrot.slane %v182, %v216
        %vm218 = vcmask 64512
        %v220 = vsel %vm218, %v198, 0
        %v223 = vsel %vm218, %v199, 0
        %v226 = vsel %vm218, %v200, 0
        %v229 = vsel %vm218, %v201, 0
        %v232 = vsel %vm218, %v202, 0
        %v235 = vsel %vm218, %v203, 0
        %v238 = vsel %vm218, %v204, 0
        %v241 = vsel %vm218, %v205, 0
        %243 = vmatprep.subr.mxu0 0.0
        %244 = vmatpush1.msra.mxu0 %v181
        %245 = vmatprep.subr.mxu0 0.0
        %246 = vmatpush1.msra.mxu0 0.0
        %247 = vmatprep.subr.mxu0 0.0
        %248 = vmatpush1.msra.mxu0 0.0
        %249 = vmatprep.subr.mxu0 0.0
        %250 = vmatpush1.msra.mxu0 0.0
        %251 = vmatprep.subr.mxu0 0.0
        %252 = vmatpush1.msra.mxu0 0.0
        %253 = vmatprep.subr.mxu0 0.0
        %254 = vmatpush1.msra.mxu0 0.0
        %255 = vmatprep.subr.mxu0 0.0
        %256 = vmatpush1.msra.mxu0 0.0
        %257 = vmatprep.subr.mxu0 0.0
        %258 = vmatpush1.msra.mxu0 0.0
        %259 = vmatprep.subr.mxu0 0.0
        %260 = vmatpush1.msra.mxu0 0.0
        %261 = vmatprep.subr.mxu0 0.0
        %262 = vmatpush1.msra.mxu0 0.0
        %263 = vmatprep.subr.mxu0 0.0
        %264 = vmatpush1.msra.mxu0 0.0
        %265 = vmatprep.subr.mxu0 0.0
        %266 = vmatpush1.msra.mxu0 0.0
        %267 = vmatprep.subr.mxu0 0.0
        %268 = vmatpush1.msra.mxu0 0.0
        %269 = vmatprep.subr.mxu0 0.0
        %270 = vmatpush1.msra.mxu0 0.0
        %271 = vmatprep.subr.mxu0 0.0
        %272 = vmatpush1.msra.mxu0 0.0
        %273 = vmatprep.subr.mxu0 0.0
        %274 = vmatpush1.msra.mxu0 0.0
        %275 = vmatprep.subr.mxu0 0.0
        %276 = vmatpush1.msra.mxu0 0.0
        %277 = vmatprep.subr.mxu0 0.0
        %278 = vmatpush1.msra.mxu0 0.0
        %279 = vmatprep.subr.mxu0 0.0
        %280 = vmatpush1.msra.mxu0 0.0
        %281 = vmatprep.subr.mxu0 0.0
        %282 = vmatpush1.msra.mxu0 0.0
        %283 = vmatprep.subr.mxu0 0.0
        %284 = vmatpush1.msra.mxu0 0.0
        %285 = vmatprep.subr.mxu0 0.0
        %286 = vmatpush1.msra.mxu0 0.0
        %287 = vmatprep.subr.mxu0 0.0
        %288 = vmatpush1.msra.mxu0 0.0
        %289 = vmatprep.subr.mxu0 0.0
        %290 = vmatpush1.msra.mxu0 0.0
        %291 = vmatprep.subr.mxu0 0.0
        %292 = vmatpush1.msra.mxu0 0.0
        %293 = vmatprep.subr.mxu0 0.0
        %294 = vmatpush1.msra.mxu0 0.0
        %295 = vmatprep.subr.mxu0 0.0
        %296 = vmatpush1.msra.mxu0 0.0
        %297 = vmatprep.subr.mxu0 0.0
        %298 = vmatpush1.msra.mxu0 0.0
        %299 = vmatprep.subr.mxu0 0.0
        %300 = vmatpush1.msra.mxu0 0.0
        %301 = vmatprep.subr.mxu0 0.0
        %302 = vmatpush1.msra.mxu0 0.0
        %303 = vmatprep.subr.mxu0 0.0
        %304 = vmatpush1.msra.mxu0 0.0
        %305 = vmatprep.subr.mxu0 0.0
        %306 = vmatpush1.msra.mxu0 0.0
        %307 = vmatprep.mubr.f32.mxu0 0.0
        %308 = vmatmul.mubr.f32.gmra.mrb[0].mxu0 %v220
        %v309 = vpop.f32.mrb[0].mxu0
        %v310 = vadd.f32 %v217, %v309
        %v311 = vpop.f32.mrb[0].mxu0
        %312 = vmatprep.mubr.f32.mxu0 0.0
        %313 = vmatmul.mubr.f32.gmra.mrb[0].mxu0 %v223
        %v314 = vpop.f32.mrb[0].mxu0
        %v315 = vadd.f32 %v217, %v314
        %v316 = vpop.f32.mrb[0].mxu0
        %317 = vmatprep.mubr.f32.mxu0 0.0
        %318 = vmatmul.mubr.f32.gmra.mrb[0].mxu0 %v226
        %v319 = vpop.f32.mrb[0].mxu0
        %v320 = vadd.f32 %v217, %v319
        %v321 = vpop.f32.mrb[0].mxu0
        %322 = vmatprep.mubr.f32.mxu0 0.0
        %323 = vmatmul.mubr.f32.gmra.mrb[0].mxu0 %v229
        %v324 = vpop.f32.mrb[0].mxu0
        %v325 = vadd.f32 %v217, %v324
        %v326 = vpop.f32.mrb[0].mxu0
        %327 = vmatprep.mubr.f32.mxu0 0.0
        %328 = vmatmul.mubr.f32.gmra.mrb[0].mxu0 %v232
        %v329 = vpop.f32.mrb[0].mxu0
        %v330 = vadd.f32 %v217, %v329
        %v331 = vpop.f32.mrb[0].mxu0
        %332 = vmatprep.mubr.f32.mxu0 0.0
        %333 = vmatmul.mubr.f32.gmra.mrb[0].mxu0 %v235
        %v334 = vpop.f32.mrb[0].mxu0
        %v335 = vadd.f32 %v217, %v334
        %v336 = vpop.f32.mrb[0].mxu0
        %337 = vmatprep.mubr.f32.mxu0 0.0
        %338 = vmatmul.mubr.f32.gmra.mrb[0].mxu0 %v238
        %v339 = vpop.f32.mrb[0].mxu0
        %v340 = vadd.f32 %v217, %v339
        %v341 = vpop.f32.mrb[0].mxu0
        %342 = vmatprep.mubr.f32.mxu0 0.0
        %343 = vmatmul.mubr.f32.gmra.mrb[0].mxu0 %v241
        %v344 = vpop.f32.mrb[0].mxu0
        %v345 = vadd.f32 %v217, %v344
        %v346 = vpop.f32.mrb[0].mxu0
        %347 = vdwg.mxu0
        %v348 = vmax.f32 %v310, 0.0
        %v349 = vmax.f32 %v315, 0.0
        %v350 = vmax.f32 %v320, 0.0
        %v351 = vmax.f32 %v325, 0.0
        %v352 = vmax.f32 %v330, 0.0
        %v353 = vmax.f32 %v335, 0.0
        %v354 = vmax.f32 %v340, 0.0
        %v355 = vmax.f32 %v345, 0.0
        %v356 = vlaneseq
        %v357 = vshrl.u32 %v356, 7
        %v358 = vsub.s32 0, %v357
        %v359 = vrot.slane %v187, %v358
        %vm360 = vcmask 261120
        %v362 = vsel %vm360, %v348, 0
        %v365 = vsel %vm360, %v349, 0
        %v368 = vsel %vm360, %v350, 0
        %v371 = vsel %vm360, %v351, 0
        %v374 = vsel %vm360, %v352, 0
        %v377 = vsel %vm360, %v353, 0
        %v380 = vsel %vm360, %v354, 0
        %v383 = vsel %vm360, %v355, 0
        %385 = vmatprep.subr.mxu0 0.0
        %386 = vmatpush1.msra.mxu0 %v183
        %387 = vmatprep.subr.mxu0 0.0
        %388 = vmatpush1.msra.mxu0 %v184
        %389 = vmatprep.subr.mxu0 0.0
        %390 = vmatpush1.msra.mxu0 %v185
        %391 = vmatprep.subr.mxu0 0.0
        %392 = vmatpush1.msra.mxu0 %v186
        %393 = vmatprep.subr.mxu0 0.0
        %394 = vmatpush1.msra.mxu0 0.0
        %395 = vmatprep.subr.mxu0 0.0
        %396 = vmatpush1.msra.mxu0 0.0
        %397 = vmatprep.subr.mxu0 0.0
        %398 = vmatpush1.msra.mxu0 0.0
        %399 = vmatprep.subr.mxu0 0.0
        %400 = vmatpush1.msra.mxu0 0.0
        %401 = vmatprep.subr.mxu0 0.0
        %402 = vmatpush1.msra.mxu0 0.0
        %403 = vmatprep.subr.mxu0 0.0
        %404 = vmatpush1.msra.mxu0 0.0
        %405 = vmatprep.subr.mxu0 0.0
        %406 = vmatpush1.msra.mxu0 0.0
        %407 = vmatprep.subr.mxu0 0.0
        %408 = vmatpush1.msra.mxu0 0.0
        %409 = vmatprep.subr.mxu0 0.0
        %410 = vmatpush1.msra.mxu0 0.0
        %411 = vmatprep.subr.mxu0 0.0
        %412 = vmatpush1.msra.mxu0 0.0
        %413 = vmatprep.subr.mxu0 0.0
        %414 = vmatpush1.msra.mxu0 0.0
        %415 = vmatprep.subr.mxu0 0.0
        %416 = vmatpush1.msra.mxu0 0.0
        %417 = vmatprep.subr.mxu0 0.0
        %418 = vmatpush1.msra.mxu0 0.0
        %419 = vmatprep.subr.mxu0 0.0
        %420 = vmatpush1.msra.mxu0 0.0
        %421 = vmatprep.subr.mxu0 0.0
        %422 = vmatpush1.msra.mxu0 0.0
        %423 = vmatprep.subr.mxu0 0.0
        %424 = vmatpush1.msra.mxu0 0.0
        %425 = vmatprep.subr.mxu0 0.0
        %426 = vmatpush1.msra.mxu0 0.0
        %427 = vmatprep.subr.mxu0 0.0
        %428 = vmatpush1.msra.mxu0 0.0
        %429 = vmatprep.subr.mxu0 0.0
        %430 = vmatpush1.msra.mxu0 0.0
        %431 = vmatprep.subr.mxu0 0.0
        %432 = vmatpush1.msra.mxu0 0.0
        %433 = vmatprep.subr.mxu0 0.0
        %434 = vmatpush1.msra.mxu0 0.0
        %435 = vmatprep.subr.mxu0 0.0
        %436 = vmatpush1.msra.mxu0 0.0
        %437 = vmatprep.subr.mxu0 0.0
        %438 = vmatpush1.msra.mxu0 0.0
        %439 = vmatprep.subr.mxu0 0.0
        %440 = vmatpush1.msra.mxu0 0.0
        %441 = vmatprep.subr.mxu0 0.0
        %442 = vmatpush1.msra.mxu0 0.0
        %443 = vmatprep.subr.mxu0 0.0
        %444 = vmatpush1.msra.mxu0 0.0
        %445 = vmatprep.subr.mxu0 0.0
        %446 = vmatpush1.msra.mxu0 0.0
        %447 = vmatprep.subr.mxu0 0.0
        %448 = vmatpush1.msra.mxu0 0.0
        %449 = vmatprep.mubr.f32.mxu0 0.0
        %450 = vmatmul.mubr.f32.gmra.mrb[0].mxu0 %v362
        %v451 = vpop.f32.mrb[0].mxu0
        %v452 = vadd.f32 %v359, %v451
        %v453 = vpop.f32.mrb[0].mxu0
        %454 = vmatprep.mubr.f32.mxu0 0.0
        %455 = vmatmul.mubr.f32.gmra.mrb[0].mxu0 %v365
        %v456 = vpop.f32.mrb[0].mxu0
        %v457 = vadd.f32 %v359, %v456
        %v458 = vpop.f32.mrb[0].mxu0
        %459 = vmatprep.mubr.f32.mxu0 0.0
        %460 = vmatmul.mubr.f32.gmra.mrb[0].mxu0 %v368
        %v461 = vpop.f32.mrb[0].mxu0
        %v462 = vadd.f32 %v359, %v461
        %v463 = vpop.f32.mrb[0].mxu0
        %464 = vmatprep.mubr.f32.mxu0 0.0
        %465 = vmatmul.mubr.f32.gmra.mrb[0].mxu0 %v371
        %v466 = vpop.f32.mrb[0].mxu0
        %v467 = vadd.f32 %v359, %v466
        %v468 = vpop.f32.mrb[0].mxu0
        %469 = vmatprep.mubr.f32.mxu0 0.0
        %470 = vmatmul.mubr.f32.gmra.mrb[0].mxu0 %v374
        %v471 = vpop.f32.mrb[0].mxu0
        %v472 = vadd.f32 %v359, %v471
        %v473 = vpop.f32.mrb[0].mxu0
        %474 = vmatprep.mubr.f32.mxu0 0.0
        %475 = vmatmul.mubr.f32.gmra.mrb[0].mxu0 %v377
        %v476 = vpop.f32.mrb[0].mxu0
        %v477 = vadd.f32 %v359, %v476
        %v478 = vpop.f32.mrb[0].mxu0
        %479 = vmatprep.mubr.f32.mxu0 0.0
        %480 = vmatmul.mubr.f32.gmra.mrb[0].mxu0 %v380
        %v481 = vpop.f32.mrb[0].mxu0
        %v482 = vadd.f32 %v359, %v481
        %v483 = vpop.f32.mrb[0].mxu0
        %484 = vmatprep.mubr.f32.mxu0 0.0
        %485 = vmatmul.mubr.f32.gmra.mrb[0].mxu0 %v383
        %v486 = vpop.f32.mrb[0].mxu0
        %v487 = vadd.f32 %v359, %v486
        %v488 = vpop.f32.mrb[0].mxu0
        %489 = vdwg.mxu0
        %v490 = vmax.f32 %v452, 0.0
        %v491 = vmax.f32 %v457, 0.0
        %v492 = vmax.f32 %v462, 0.0
        %v493 = vmax.f32 %v467, 0.0
        %v494 = vmax.f32 %v472, 0.0
        %v495 = vmax.f32 %v477, 0.0
        %v496 = vmax.f32 %v482, 0.0
        %v497 = vmax.f32 %v487, 0.0
        %498 = vxpose.xlu0.b32.start [1/16] %v490, 128
        %499 = vxpose.xlu0.b32.cont [2/16] %v491, 128
        %500 = vxpose.xlu0.b32.cont [3/16] %v492, 128
        %501 = vxpose.xlu0.b32.cont [4/16] %v493, 128
        %502 = vxpose.xlu0.b32.cont [5/16] %v494, 128
        %503 = vxpose.xlu0.b32.cont [6/16] %v495, 128
        %504 = vxpose.xlu0.b32.cont [7/16] %v496, 128
        %505 = vxpose.xlu0.b32.cont [8/16] %v497, 128
        %506 = vxpose.xlu0.b32.cont [9/16] 0.0, 128
        %507 = vxpose.xlu0.b32.cont [10/16] 0.0, 128
        %508 = vxpose.xlu0.b32.cont [11/16] 0.0, 128
        %509 = vxpose.xlu0.b32.cont [12/16] 0.0, 128
        %510 = vxpose.xlu0.b32.cont [13/16] 0.0, 128
        %511 = vxpose.xlu0.b32.cont [14/16] 0.0, 128
        %512 = vxpose.xlu0.b32.cont [15/16] 0.0, 128
        %513 = vxpose.xlu0.b32.end [16/16] 0.0, 128
        %v514 = vpop.trf.xlu0
        %v515 = vpop.trf.xlu0
        %v516 = vpop.trf.xlu0
        %v517 = vpop.trf.xlu0
        %v518 = vpop.trf.xlu0
        %v519 = vpop.trf.xlu0
        %v520 = vpop.trf.xlu0
        %v521 = vpop.trf.xlu0
        %v522 = vpop.trf.xlu0
        %v523 = vpop.trf.xlu0
        %v524 = vpop.trf.xlu0
        %v525 = vpop.trf.xlu0
        %v526 = vpop.trf.xlu0
        %v527 = vpop.trf.xlu0
        %v528 = vpop.trf.xlu0
        %v529 = vpop.trf.xlu0
        %v530 = vlaneseq
        %v531 = vand.u32 %v530, 127
        %532 = vset.pattern.permute.xlu0 9
        %533 = vperm.xlu0 %532, %v206
        %v534 = vpop.permute.xlu0 %533
        %535 = vset.pattern.permute.xlu0 9
        %536 = vperm.xlu0 %535, %v207
        %v537 = vpop.permute.xlu0 %536
        %538 = vset.pattern.permute.xlu0 9
        %539 = vperm.xlu0 %538, %v208
        %v540 = vpop.permute.xlu0 %539
        %541 = vset.pattern.permute.xlu0 9
        %542 = vperm.xlu0 %541, %v209
        %v543 = vpop.permute.xlu0 %542
        %544 = vset.pattern.permute.xlu0 9
        %545 = vperm.xlu0 %544, %v210
        %v546 = vpop.permute.xlu0 %545
        %547 = vset.pattern.permute.xlu0 9
        %548 = vperm.xlu0 %547, %v211
        %v549 = vpop.permute.xlu0 %548
        %550 = vset.pattern.permute.xlu0 9
        %551 = vperm.xlu0 %550, %v212
        %v552 = vpop.permute.xlu0 %551
        %553 = vset.pattern.permute.xlu0 9
        %554 = vperm.xlu0 %553, %v213
        %v555 = vpop.permute.xlu0 %554
        %vm556 = vcmp.eq.s32.totalorder %v531, %v534
        %vm557 = vcmp.eq.s32.totalorder %v531, %v537
        %vm558 = vcmp.eq.s32.totalorder %v531, %v540
        %vm559 = vcmp.eq.s32.totalorder %v531, %v543
        %vm560 = vcmp.eq.s32.totalorder %v531, %v546
        %vm561 = vcmp.eq.s32.totalorder %v531, %v549
        %vm562 = vcmp.eq.s32.totalorder %v531, %v552
        %vm563 = vcmp.eq.s32.totalorder %v531, %v555
        %v564 = vsel %vm556, 1, 0
        %v565 = vsel %vm557, 1, 0
        %v566 = vsel %vm558, 1, 0
        %v567 = vsel %vm559, 1, 0
        %v568 = vsel %vm560, 1, 0
        %v569 = vsel %vm561, 1, 0
        %v570 = vsel %vm562, 1, 0
        %v571 = vsel %vm563, 1, 0
        %v572 = vcvt.s32.f32 %v564
        %v573 = vcvt.s32.f32 %v565
        %v574 = vcvt.s32.f32 %v566
        %v575 = vcvt.s32.f32 %v567
        %v576 = vcvt.s32.f32 %v568
        %v577 = vcvt.s32.f32 %v569
        %v578 = vcvt.s32.f32 %v570
        %v579 = vcvt.s32.f32 %v571
        %v580 = vlaneseq
        %v581 = vshrl.u32 %v580, 7
        %v582 = vlaneseq
        %v583 = vshrl.u32 %v582, 7
        %v584 = vsub.s32 0, %v583
        %v585 = vrot.slane %v192, %v584
        %v587 = vsel %vm360, %v490, 0
        %v590 = vsel %vm360, %v491, 0
        %592 = vmatprep.subr.mxu0 0.0
        %593 = vmatpush1.msra.mxu0 %v188
        %594 = vmatprep.subr.mxu0 0.0
        %595 = vmatpush1.msra.mxu0 %v189
        %596 = vmatprep.subr.mxu0 0.0
        %597 = vmatpush1.msra.mxu0 %v190
        %598 = vmatprep.subr.mxu0 0.0
        %599 = vmatpush1.msra.mxu0 %v191
        %600 = vmatprep.subr.mxu0 0.0
        %601 = vmatpush1.msra.mxu0 0.0
        %602 = vmatprep.subr.mxu0 0.0
        %603 = vmatpush1.msra.mxu0 0.0
        %604 = vmatprep.subr.mxu0 0.0
        %605 = vmatpush1.msra.mxu0 0.0
        %606 = vmatprep.subr.mxu0 0.0
        %607 = vmatpush1.msra.mxu0 0.0
        %608 = vmatprep.subr.mxu0 0.0
        %609 = vmatpush1.msra.mxu0 0.0
        %610 = vmatprep.subr.mxu0 0.0
        %611 = vmatpush1.msra.mxu0 0.0
        %612 = vmatprep.subr.mxu0 0.0
        %613 = vmatpush1.msra.mxu0 0.0
        %614 = vmatprep.subr.mxu0 0.0
        %615 = vmatpush1.msra.mxu0 0.0
        %616 = vmatprep.subr.mxu0 0.0
        %617 = vmatpush1.msra.mxu0 0.0
        %618 = vmatprep.subr.mxu0 0.0
        %619 = vmatpush1.msra.mxu0 0.0
        %620 = vmatprep.subr.mxu0 0.0
        %621 = vmatpush1.msra.mxu0 0.0
        %622 = vmatprep.subr.mxu0 0.0
        %623 = vmatpush1.msra.mxu0 0.0
        %624 = vmatprep.subr.mxu0 0.0
        %625 = vmatpush1.msra.mxu0 0.0
        %626 = vmatprep.subr.mxu0 0.0
        %627 = vmatpush1.msra.mxu0 0.0
        %628 = vmatprep.subr.mxu0 0.0
        %629 = vmatpush1.msra.mxu0 0.0
        %630 = vmatprep.subr.mxu0 0.0
        %631 = vmatpush1.msra.mxu0 0.0
        %632 = vmatprep.subr.mxu0 0.0
        %633 = vmatpush1.msra.mxu0 0.0
        %634 = vmatprep.subr.mxu0 0.0
        %635 = vmatpush1.msra.mxu0 0.0
        %636 = vmatprep.subr.mxu0 0.0
        %637 = vmatpush1.msra.mxu0 0.0
        %638 = vmatprep.subr.mxu0 0.0
        %639 = vmatpush1.msra.mxu0 0.0
        %640 = vmatprep.subr.mxu0 0.0
        %641 = vmatpush1.msra.mxu0 0.0
        %642 = vmatprep.subr.mxu0 0.0
        %643 = vmatpush1.msra.mxu0 0.0
        %644 = vmatprep.subr.mxu0 0.0
        %645 = vmatpush1.msra.mxu0 0.0
        %646 = vmatprep.subr.mxu0 0.0
        %647 = vmatpush1.msra.mxu0 0.0
        %648 = vmatprep.subr.mxu0 0.0
        %649 = vmatpush1.msra.mxu0 0.0
        %650 = vmatprep.subr.mxu0 0.0
        %651 = vmatpush1.msra.mxu0 0.0
        %652 = vmatprep.subr.mxu0 0.0
        %653 = vmatpush1.msra.mxu0 0.0
        %654 = vmatprep.subr.mxu0 0.0
        %655 = vmatpush1.msra.mxu0 0.0
        %656 = vmatprep.mubr.f32.mxu0 0.0
        %657 = vmatmul.mubr.f32.gmra.mrb[0].mxu0 %v587
        %v658 = vpop.f32.mrb[0].mxu0
        %v659 = vadd.f32 %v585, %v658
        %v660 = vpop.f32.mrb[0].mxu0
        %661 = vmatprep.mubr.f32.mxu0 0.0
        %662 = vmatmul.mubr.f32.gmra.mrb[0].mxu0 %v590
        %v663 = vpop.f32.mrb[0].mxu0
        %v664 = vadd.f32 %v585, %v663
        %v665 = vpop.f32.mrb[0].mxu0
        %666 = vdwg.mxu0
        %v667 = vmul.f32 %v659, %v572
        %v668 = vmul.f32 %v664, %v573
        %vm669 = vcmask 130048
        %v670 = vsel %vm669, %v667, 0.0
        %671 = vadd.xlane.f32.xlu0 %v670
        %v672 = vpop.xlane.xlu0 %671
        %v673 = vsel %vm669, %v668, 0.0
        %674 = vadd.xlane.f32.xlu0 %v673
        %v675 = vpop.xlane.xlu0 %674
        %v676 = vsub.f32 %v672, %v198
        %vm677 = vcmp.lt.s32.totalorder %v581, 8
        %v678 = vsel %vm677, 1, 0
        %v679 = vcvt.s32.f32 %v678
        %v680 = vmul.f32 %v676, %v679
        %v681 = vmul.f32 %v680, %v680
        %683 = vrot.lane.b32.xlu0 %v681, 120
        %v684 = vpop.permute.xlu0 %683
        %vm686 = vcmask 7168
        %v687 = vsel %vm686, %v684, 0.0
        %688 = vadd.xlane.f32.xlu0 %v687
        %v689 = vpop.xlane.xlu0 %688
        %v690 = vrot.slane %v689, 4
        %v691 = vadd.f32 %v689, %v690
        %v692 = vrot.slane %v691, 2
        %v693 = vadd.f32 %v691, %v692
        %v694 = vrot.slane %v693, 1
        %v695 = vadd.f32 %v693, %v694
        %s696 = vtos %v695
        %v697 = vstv %s696
        %v698 = vmul.f32 %v697, 0.125
        %vm699 = vcmask 0
        %700 = vst.msk [vmem:[%s163] sm:$0x1] %vm699, %v698
        %v701 = vsub.f32 %v199, %v675
        %703 = vset.pattern.permute.xlu0 8
        %704 = vperm.xlu0 %703, %v701
        %v705 = vpop.permute.xlu0 %704
        %v707 = vmul.f32 %v705, %v573
        %712 = vrot.lane.b32.xlu0 %v514, 120
        %v713 = vpop.permute.xlu0 %712
        %714 = vrot.lane.b32.xlu0 %v515, 120
        %v715 = vpop.permute.xlu0 %714
        %716 = vrot.lane.b32.xlu0 %v516, 120
        %v717 = vpop.permute.xlu0 %716
        %718 = vrot.lane.b32.xlu0 %v517, 120
        %v719 = vpop.permute.xlu0 %718
        %v720 = vsel %vm218, %v713, 0
        %v722 = vsel %vm218, %v715, 0
        %v724 = vsel %vm218, %v717, 0
        %v726 = vsel %vm218, %v719, 0
        %728 = vmatprep.subr.mxu0 0.0
        %729 = vmatpush1.msra.mxu0 %v707
        %730 = vmatprep.subr.mxu0 0.0
        %731 = vmatpush1.msra.mxu0 0.0
        %732 = vmatprep.subr.mxu0 0.0
        %733 = vmatpush1.msra.mxu0 0.0
        %734 = vmatprep.subr.mxu0 0.0
        %735 = vmatpush1.msra.mxu0 0.0
        %736 = vmatprep.subr.mxu0 0.0
        %737 = vmatpush1.msra.mxu0 0.0
        %738 = vmatprep.subr.mxu0 0.0
        %739 = vmatpush1.msra.mxu0 0.0
        %740 = vmatprep.subr.mxu0 0.0
        %741 = vmatpush1.msra.mxu0 0.0
        %742 = vmatprep.subr.mxu0 0.0
        %743 = vmatpush1.msra.mxu0 0.0
        %744 = vmatprep.subr.mxu0 0.0
        %745 = vmatpush1.msra.mxu0 0.0
        %746 = vmatprep.subr.mxu0 0.0
        %747 = vmatpush1.msra.mxu0 0.0
        %748 = vmatprep.subr.mxu0 0.0
        %749 = vmatpush1.msra.mxu0 0.0
        %750 = vmatprep.subr.mxu0 0.0
        %751 = vmatpush1.msra.mxu0 0.0
        %752 = vmatprep.subr.mxu0 0.0
        %753 = vmatpush1.msra.mxu0 0.0
        %754 = vmatprep.subr.mxu0 0.0
        %755 = vmatpush1.msra.mxu0 0.0
        %756 = vmatprep.subr.mxu0 0.0
        %757 = vmatpush1.msra.mxu0 0.0
        %758 = vmatprep.subr.mxu0 0.0
        %759 = vmatpush1.msra.mxu0 0.0
        %760 = vmatprep.subr.mxu0 0.0
        %761 = vmatpush1.msra.mxu0 0.0
        %762 = vmatprep.subr.mxu0 0.0
        %763 = vmatpush1.msra.mxu0 0.0
        %764 = vmatprep.subr.mxu0 0.0
        %765 = vmatpush1.msra.mxu0 0.0
        %766 = vmatprep.subr.mxu0 0.0
        %767 = vmatpush1.msra.mxu0 0.0
        %768 = vmatprep.subr.mxu0 0.0
        %769 = vmatpush1.msra.mxu0 0.0
        %770 = vmatprep.subr.mxu0 0.0
        %771 = vmatpush1.msra.mxu0 0.0
        %772 = vmatprep.subr.mxu0 0.0
        %773 = vmatpush1.msra.mxu0 0.0
        %774 = vmatprep.subr.mxu0 0.0
        %775 = vmatpush1.msra.mxu0 0.0
        %776 = vmatprep.subr.mxu0 0.0
        %777 = vmatpush1.msra.mxu0 0.0
        %778 = vmatprep.subr.mxu0 0.0
        %779 = vmatpush1.msra.mxu0 0.0
        %780 = vmatprep.subr.mxu0 0.0
        %781 = vmatpush1.msra.mxu0 0.0
        %782 = vmatprep.subr.mxu0 0.0
        %783 = vmatpush1.msra.mxu0 0.0
        %784 = vmatprep.subr.mxu0 0.0
        %785 = vmatpush1.msra.mxu0 0.0
        %786 = vmatprep.subr.mxu0 0.0
        %787 = vmatpush1.msra.mxu0 0.0
        %788 = vmatprep.subr.mxu0 0.0
        %789 = vmatpush1.msra.mxu0 0.0
        %790 = vmatprep.subr.mxu0 0.0
        %791 = vmatpush1.msra.mxu0 0.0
        %792 = vmatprep.mubr.f32.mxu0 0.0
        %793 = vmatmul.mubr.f32.gmra.mrb[0].mxu0 %v720
        %v794 = vpop.f32.mrb[0].mxu0
        %v795 = vadd.f32 0.0, %v794
        %v796 = vpop.f32.mrb[0].mxu0
        %797 = vmatprep.mubr.f32.mxu0 0.0
        %798 = vmatmul.mubr.f32.gmra.mrb[0].mxu0 %v722
        %v799 = vpop.f32.mrb[0].mxu0
        %v800 = vadd.f32 0.0, %v799
        %v801 = vpop.f32.mrb[0].mxu0
        %802 = vmatprep.mubr.f32.mxu0 0.0
        %803 = vmatmul.mubr.f32.gmra.mrb[0].mxu0 %v724
        %v804 = vpop.f32.mrb[0].mxu0
        %v805 = vadd.f32 0.0, %v804
        %v806 = vpop.f32.mrb[0].mxu0
        %807 = vmatprep.mubr.f32.mxu0 0.0
        %808 = vmatmul.mubr.f32.gmra.mrb[0].mxu0 %v726
        %v809 = vpop.f32.mrb[0].mxu0
        %v810 = vadd.f32 0.0, %v809
        %v811 = vpop.f32.mrb[0].mxu0
        %812 = vdwg.mxu0
        %v813 = vmul.f32 %v795, 0.125
        %v814 = vmul.f32 %v800, 0.125
        %v815 = vmul.f32 %v805, 0.125
        %v816 = vmul.f32 %v810, 0.125
        %v817 = vmul.f32 %v196, %v813
        %v818 = vmul.f32 %v196, %v814
        %v819 = vmul.f32 %v196, %v815
        %v820 = vmul.f32 %v196, %v816
        %v821 = vadd.f32 %v188, %v817
        %v822 = vadd.f32 %v189, %v818
        %v823 = vadd.f32 %v190, %v819
        %v824 = vadd.f32 %v191, %v820
        %v826 = vsel %vm360, %v492, 0
        %v829 = vsel %vm360, %v493, 0
        %831 = vmatprep.subr.mxu0 0.0
        %832 = vmatpush1.msra.mxu0 %v821
        %833 = vmatprep.subr.mxu0 0.0
        %834 = vmatpush1.msra.mxu0 %v822
        %835 = vmatprep.subr.mxu0 0.0
        %836 = vmatpush1.msra.mxu0 %v823
        %837 = vmatprep.subr.mxu0 0.0
        %838 = vmatpush1.msra.mxu0 %v824
        %839 = vmatprep.subr.mxu0 0.0
        %840 = vmatpush1.msra.mxu0 0.0
        %841 = vmatprep.subr.mxu0 0.0
        %842 = vmatpush1.msra.mxu0 0.0
        %843 = vmatprep.subr.mxu0 0.0
        %844 = vmatpush1.msra.mxu0 0.0
        %845 = vmatprep.subr.mxu0 0.0
        %846 = vmatpush1.msra.mxu0 0.0
        %847 = vmatprep.subr.mxu0 0.0
        %848 = vmatpush1.msra.mxu0 0.0
        %849 = vmatprep.subr.mxu0 0.0
        %850 = vmatpush1.msra.mxu0 0.0
        %851 = vmatprep.subr.mxu0 0.0
        %852 = vmatpush1.msra.mxu0 0.0
        %853 = vmatprep.subr.mxu0 0.0
        %854 = vmatpush1.msra.mxu0 0.0
        %855 = vmatprep.subr.mxu0 0.0
        %856 = vmatpush1.msra.mxu0 0.0
        %857 = vmatprep.subr.mxu0 0.0
        %858 = vmatpush1.msra.mxu0 0.0
        %859 = vmatprep.subr.mxu0 0.0
        %860 = vmatpush1.msra.mxu0 0.0
        %861 = vmatprep.subr.mxu0 0.0
        %862 = vmatpush1.msra.mxu0 0.0
        %863 = vmatprep.subr.mxu0 0.0
        %864 = vmatpush1.msra.mxu0 0.0
        %865 = vmatprep.subr.mxu0 0.0
        %866 = vmatpush1.msra.mxu0 0.0
        %867 = vmatprep.subr.mxu0 0.0
        %868 = vmatpush1.msra.mxu0 0.0
        %869 = vmatprep.subr.mxu0 0.0
        %870 = vmatpush1.msra.mxu0 0.0
        %871 = vmatprep.subr.mxu0 0.0
        %872 = vmatpush1.msra.mxu0 0.0
        %873 = vmatprep.subr.mxu0 0.0
        %874 = vmatpush1.msra.mxu0 0.0
        %875 = vmatprep.subr.mxu0 0.0
        %876 = vmatpush1.msra.mxu0 0.0
        %877 = vmatprep.subr.mxu0 0.0
        %878 = vmatpush1.msra.mxu0 0.0
        %879 = vmatprep.subr.mxu0 0.0
        %880 = vmatpush1.msra.mxu0 0.0
        %881 = vmatprep.subr.mxu0 0.0
        %882 = vmatpush1.msra.mxu0 0.0
        %883 = vmatprep.subr.mxu0 0.0
        %884 = vmatpush1.msra.mxu0 0.0
        %885 = vmatprep.subr.mxu0 0.0
        %886 = vmatpush1.msra.mxu0 0.0
        %887 = vmatprep.subr.mxu0 0.0
        %888 = vmatpush1.msra.mxu0 0.0
        %889 = vmatprep.subr.mxu0 0.0
        %890 = vmatpush1.msra.mxu0 0.0
        %891 = vmatprep.subr.mxu0 0.0
        %892 = vmatpush1.msra.mxu0 0.0
        %893 = vmatprep.subr.mxu0 0.0
        %894 = vmatpush1.msra.mxu0 0.0
        %895 = vmatprep.mubr.f32.mxu0 0.0
        %896 = vmatmul.mubr.f32.gmra.mrb[0].mxu0 %v826
        %v897 = vpop.f32.mrb[0].mxu0
        %v898 = vadd.f32 %v585, %v897
        %v899 = vpop.f32.mrb[0].mxu0
        %900 = vmatprep.mubr.f32.mxu0 0.0
        %901 = vmatmul.mubr.f32.gmra.mrb[0].mxu0 %v829
        %v902 = vpop.f32.mrb[0].mxu0
        %v903 = vadd.f32 %v585, %v902
        %v904 = vpop.f32.mrb[0].mxu0
        %905 = vdwg.mxu0
        %v906 = vmul.f32 %v898, %v574
        %v907 = vmul.f32 %v903, %v575
        %v908 = vsel %vm669, %v906, 0.0
        %909 = vadd.xlane.f32.xlu0 %v908
        %v910 = vpop.xlane.xlu0 %909
        %v911 = vsel %vm669, %v907, 0.0
        %912 = vadd.xlane.f32.xlu0 %v911
        %v913 = vpop.xlane.xlu0 %912
        %v914 = vsub.f32 %v910, %v200
        %v915 = vmul.f32 %v914, %v679
        %v916 = vmul.f32 %v915, %v915
        %918 = vrot.lane.b32.xlu0 %v916, 120
        %v919 = vpop.permute.xlu0 %918
        %v921 = vsel %vm686, %v919, 0.0
        %922 = vadd.xlane.f32.xlu0 %v921
        %v923 = vpop.xlane.xlu0 %922
        %v924 = vrot.slane %v923, 4
        %v925 = vadd.f32 %v923, %v924
        %v926 = vrot.slane %v925, 2
        %v927 = vadd.f32 %v925, %v926
        %v928 = vrot.slane %v927, 1
        %v929 = vadd.f32 %v927, %v928
        %s930 = vtos %v929
        %v931 = vstv %s930
        %v932 = vmul.f32 %v931, 0.125
        %vm933 = vcmask 8200
        %934 = vst.msk [vmem:[%s163] sm:$0x1] %vm933, %v932
        %v935 = vsub.f32 %v201, %v913
        %937 = vset.pattern.permute.xlu0 8
        %938 = vperm.xlu0 %937, %v935
        %v939 = vpop.permute.xlu0 %938
        %v941 = vmul.f32 %v939, %v575
        %942 = vrot.lane.b32.xlu0 %v514, 104
        %v943 = vpop.permute.xlu0 %942
        %944 = vrot.lane.b32.xlu0 %v515, 104
        %v945 = vpop.permute.xlu0 %944
        %946 = vrot.lane.b32.xlu0 %v516, 104
        %v947 = vpop.permute.xlu0 %946
        %948 = vrot.lane.b32.xlu0 %v517, 104
        %v949 = vpop.permute.xlu0 %948
        %v950 = vsel %vm218, %v943, 0
        %v952 = vsel %vm218, %v945, 0
        %v954 = vsel %vm218, %v947, 0
        %v956 = vsel %vm218, %v949, 0
        %958 = vmatprep.subr.mxu0 0.0
        %959 = vmatpush1.msra.mxu0 %v941
        %960 = vmatprep.subr.mxu0 0.0
        %961 = vmatpush1.msra.mxu0 0.0
        %962 = vmatprep.subr.mxu0 0.0
        %963 = vmatpush1.msra.mxu0 0.0
        %964 = vmatprep.subr.mxu0 0.0
        %965 = vmatpush1.msra.mxu0 0.0
        %966 = vmatprep.subr.mxu0 0.0
        %967 = vmatpush1.msra.mxu0 0.0
        %968 = vmatprep.subr.mxu0 0.0
        %969 = vmatpush1.msra.mxu0 0.0
        %970 = vmatprep.subr.mxu0 0.0
        %971 = vmatpush1.msra.mxu0 0.0
        %972 = vmatprep.subr.mxu0 0.0
        %973 = vmatpush1.msra.mxu0 0.0
        %974 = vmatprep.subr.mxu0 0.0
        %975 = vmatpush1.msra.mxu0 0.0
        %976 = vmatprep.subr.mxu0 0.0
        %977 = vmatpush1.msra.mxu0 0.0
        %978 = vmatprep.subr.mxu0 0.0
        %979 = vmatpush1.msra.mxu0 0.0
        %980 = vmatprep.subr.mxu0 0.0
        %981 = vmatpush1.msra.mxu0 0.0
        %982 = vmatprep.subr.mxu0 0.0
        %983 = vmatpush1.msra.mxu0 0.0
        %984 = vmatprep.subr.mxu0 0.0
        %985 = vmatpush1.msra.mxu0 0.0
        %986 = vmatprep.subr.mxu0 0.0
        %987 = vmatpush1.msra.mxu0 0.0
        %988 = vmatprep.subr.mxu0 0.0
        %989 = vmatpush1.msra.mxu0 0.0
        %990 = vmatprep.subr.mxu0 0.0
        %991 = vmatpush1.msra.mxu0 0.0
        %992 = vmatprep.subr.mxu0 0.0
        %993 = vmatpush1.msra.mxu0 0.0
        %994 = vmatprep.subr.mxu0 0.0
        %995 = vmatpush1.msra.mxu0 0.0
        %996 = vmatprep.subr.mxu0 0.0
        %997 = vmatpush1.msra.mxu0 0.0
        %998 = vmatprep.subr.mxu0 0.0
        %999 = vmatpush1.msra.mxu0 0.0
        %1000 = vmatprep.subr.mxu0 0.0
        %1001 = vmatpush1.msra.mxu0 0.0
        %1002 = vmatprep.subr.mxu0 0.0
        %1003 = vmatpush1.msra.mxu0 0.0
        %1004 = vmatprep.subr.mxu0 0.0
        %1005 = vmatpush1.msra.mxu0 0.0
        %1006 = vmatprep.subr.mxu0 0.0
        %1007 = vmatpush1.msra.mxu0 0.0
        %1008 = vmatprep.subr.mxu0 0.0
        %1009 = vmatpush1.msra.mxu0 0.0
        %1010 = vmatprep.subr.mxu0 0.0
        %1011 = vmatpush1.msra.mxu0 0.0
        %1012 = vmatprep.subr.mxu0 0.0
        %1013 = vmatpush1.msra.mxu0 0.0
        %1014 = vmatprep.subr.mxu0 0.0
        %1015 = vmatpush1.msra.mxu0 0.0
        %1016 = vmatprep.subr.mxu0 0.0
        %1017 = vmatpush1.msra.mxu0 0.0
        %1018 = vmatprep.subr.mxu0 0.0
        %1019 = vmatpush1.msra.mxu0 0.0
        %1020 = vmatprep.subr.mxu0 0.0
        %1021 = vmatpush1.msra.mxu0 0.0
        %1022 = vmatprep.mubr.f32.mxu0 0.0
        %1023 = vmatmul.mubr.f32.gmra.mrb[0].mxu0 %v950
        %v1024 = vpop.f32.mrb[0].mxu0
        %v1025 = vadd.f32 0.0, %v1024
        %v1026 = vpop.f32.mrb[0].mxu0
        %1027 = vmatprep.mubr.f32.mxu0 0.0
        %1028 = vmatmul.mubr.f32.gmra.mrb[0].mxu0 %v952
        %v1029 = vpop.f32.mrb[0].mxu0
        %v1030 = vadd.f32 0.0, %v1029
        %v1031 = vpop.f32.mrb[0].mxu0
        %1032 = vmatprep.mubr.f32.mxu0 0.0
        %1033 = vmatmul.mubr.f32.gmra.mrb[0].mxu0 %v954
        %v1034 = vpop.f32.mrb[0].mxu0
        %v1035 = vadd.f32 0.0, %v1034
        %v1036 = vpop.f32.mrb[0].mxu0
        %1037 = vmatprep.mubr.f32.mxu0 0.0
        %1038 = vmatmul.mubr.f32.gmra.mrb[0].mxu0 %v956
        %v1039 = vpop.f32.mrb[0].mxu0
        %v1040 = vadd.f32 0.0, %v1039
        %v1041 = vpop.f32.mrb[0].mxu0
        %1042 = vdwg.mxu0
        %v1043 = vmul.f32 %v1025, 0.125
        %v1044 = vmul.f32 %v1030, 0.125
        %v1045 = vmul.f32 %v1035, 0.125
        %v1046 = vmul.f32 %v1040, 0.125
        %v1047 = vmul.f32 %v196, %v1043
        %v1048 = vmul.f32 %v196, %v1044
        %v1049 = vmul.f32 %v196, %v1045
        %v1050 = vmul.f32 %v196, %v1046
        %v1051 = vadd.f32 %v821, %v1047
        %v1052 = vadd.f32 %v822, %v1048
        %v1053 = vadd.f32 %v823, %v1049
        %v1054 = vadd.f32 %v824, %v1050
        %v1056 = vsel %vm360, %v494, 0
        %v1059 = vsel %vm360, %v495, 0
        %1061 = vmatprep.subr.mxu0 0.0
        %1062 = vmatpush1.msra.mxu0 %v1051
        %1063 = vmatprep.subr.mxu0 0.0
        %1064 = vmatpush1.msra.mxu0 %v1052
        %1065 = vmatprep.subr.mxu0 0.0
        %1066 = vmatpush1.msra.mxu0 %v1053
        %1067 = vmatprep.subr.mxu0 0.0
        %1068 = vmatpush1.msra.mxu0 %v1054
        %1069 = vmatprep.subr.mxu0 0.0
        %1070 = vmatpush1.msra.mxu0 0.0
        %1071 = vmatprep.subr.mxu0 0.0
        %1072 = vmatpush1.msra.mxu0 0.0
        %1073 = vmatprep.subr.mxu0 0.0
        %1074 = vmatpush1.msra.mxu0 0.0
        %1075 = vmatprep.subr.mxu0 0.0
        %1076 = vmatpush1.msra.mxu0 0.0
        %1077 = vmatprep.subr.mxu0 0.0
        %1078 = vmatpush1.msra.mxu0 0.0
        %1079 = vmatprep.subr.mxu0 0.0
        %1080 = vmatpush1.msra.mxu0 0.0
        %1081 = vmatprep.subr.mxu0 0.0
        %1082 = vmatpush1.msra.mxu0 0.0
        %1083 = vmatprep.subr.mxu0 0.0
        %1084 = vmatpush1.msra.mxu0 0.0
        %1085 = vmatprep.subr.mxu0 0.0
        %1086 = vmatpush1.msra.mxu0 0.0
        %1087 = vmatprep.subr.mxu0 0.0
        %1088 = vmatpush1.msra.mxu0 0.0
        %1089 = vmatprep.subr.mxu0 0.0
        %1090 = vmatpush1.msra.mxu0 0.0
        %1091 = vmatprep.subr.mxu0 0.0
        %1092 = vmatpush1.msra.mxu0 0.0
        %1093 = vmatprep.subr.mxu0 0.0
        %1094 = vmatpush1.msra.mxu0 0.0
        %1095 = vmatprep.subr.mxu0 0.0
        %1096 = vmatpush1.msra.mxu0 0.0
        %1097 = vmatprep.subr.mxu0 0.0
        %1098 = vmatpush1.msra.mxu0 0.0
        %1099 = vmatprep.subr.mxu0 0.0
        %1100 = vmatpush1.msra.mxu0 0.0
        %1101 = vmatprep.subr.mxu0 0.0
        %1102 = vmatpush1.msra.mxu0 0.0
        %1103 = vmatprep.subr.mxu0 0.0
        %1104 = vmatpush1.msra.mxu0 0.0
        %1105 = vmatprep.subr.mxu0 0.0
        %1106 = vmatpush1.msra.mxu0 0.0
        %1107 = vmatprep.subr.mxu0 0.0
        %1108 = vmatpush1.msra.mxu0 0.0
        %1109 = vmatprep.subr.mxu0 0.0
        %1110 = vmatpush1.msra.mxu0 0.0
        %1111 = vmatprep.subr.mxu0 0.0
        %1112 = vmatpush1.msra.mxu0 0.0
        %1113 = vmatprep.subr.mxu0 0.0
        %1114 = vmatpush1.msra.mxu0 0.0
        %1115 = vmatprep.subr.mxu0 0.0
        %1116 = vmatpush1.msra.mxu0 0.0
        %1117 = vmatprep.subr.mxu0 0.0
        %1118 = vmatpush1.msra.mxu0 0.0
        %1119 = vmatprep.subr.mxu0 0.0
        %1120 = vmatpush1.msra.mxu0 0.0
        %1121 = vmatprep.subr.mxu0 0.0
        %1122 = vmatpush1.msra.mxu0 0.0
        %1123 = vmatprep.subr.mxu0 0.0
        %1124 = vmatpush1.msra.mxu0 0.0
        %1125 = vmatprep.mubr.f32.mxu0 0.0
        %1126 = vmatmul.mubr.f32.gmra.mrb[0].mxu0 %v1056
        %v1127 = vpop.f32.mrb[0].mxu0
        %v1128 = vadd.f32 %v585, %v1127
        %v1129 = vpop.f32.mrb[0].mxu0
        %1130 = vmatprep.mubr.f32.mxu0 0.0
        %1131 = vmatmul.mubr.f32.gmra.mrb[0].mxu0 %v1059
        %v1132 = vpop.f32.mrb[0].mxu0
        %v1133 = vadd.f32 %v585, %v1132
        %v1134 = vpop.f32.mrb[0].mxu0
        %1135 = vdwg.mxu0
        %v1136 = vmul.f32 %v1128, %v576
        %v1137 = vmul.f32 %v1133, %v577
        %v1138 = vsel %vm669, %v1136, 0.0
        %1139 = vadd.xlane.f32.xlu0 %v1138
        %v1140 = vpop.xlane.xlu0 %1139
        %v1141 = vsel %vm669, %v1137, 0.0
        %1142 = vadd.xlane.f32.xlu0 %v1141
        %v1143 = vpop.xlane.xlu0 %1142
        %v1144 = vsub.f32 %v1140, %v202
        %vm1145 = vcmp.lt.s32.totalorder %v581, 4
        %v1146 = vsel %vm1145, 1, 0
        %v1147 = vcvt.s32.f32 %v1146
        %v1148 = vmul.f32 %v1144, %v1147
        %v1149 = vmul.f32 %v1148, %v1148
        %1151 = vrot.lane.b32.xlu0 %v1149, 120
        %v1152 = vpop.permute.xlu0 %1151
        %v1154 = vsel %vm686, %v1152, 0.0
        %1155 = vadd.xlane.f32.xlu0 %v1154
        %v1156 = vpop.xlane.xlu0 %1155
        %v1157 = vrot.slane %v1156, 4
        %v1158 = vadd.f32 %v1156, %v1157
        %v1159 = vrot.slane %v1158, 2
        %v1160 = vadd.f32 %v1158, %v1159
        %v1161 = vrot.slane %v1160, 1
        %v1162 = vadd.f32 %v1160, %v1161
        %s1163 = vtos %v1162
        %v1164 = vstv %s1163
        %v1165 = vmul.f32 %v1164, 0.25
        %vm1166 = vcmask 16400
        %1167 = vst.msk [vmem:[%s163] sm:$0x1] %vm1166, %v1165
        %v1168 = vsub.f32 %v203, %v1143
        %1170 = vset.pattern.permute.xlu0 8
        %1171 = vperm.xlu0 %1170, %v1168
        %v1172 = vpop.permute.xlu0 %1171
        %v1174 = vmul.f32 %v1172, %v577
        %1175 = vrot.lane.b32.xlu0 %v514, 88
        %v1176 = vpop.permute.xlu0 %1175
        %1177 = vrot.lane.b32.xlu0 %v515, 88
        %v1178 = vpop.permute.xlu0 %1177
        %1179 = vrot.lane.b32.xlu0 %v516, 88
        %v1180 = vpop.permute.xlu0 %1179
        %1181 = vrot.lane.b32.xlu0 %v517, 88
        %v1182 = vpop.permute.xlu0 %1181
        %v1183 = vsel %vm218, %v1176, 0
        %v1185 = vsel %vm218, %v1178, 0
        %v1187 = vsel %vm218, %v1180, 0
        %v1189 = vsel %vm218, %v1182, 0
        %1191 = vmatprep.subr.mxu0 0.0
        %1192 = vmatpush1.msra.mxu0 %v1174
        %1193 = vmatprep.subr.mxu0 0.0
        %1194 = vmatpush1.msra.mxu0 0.0
        %1195 = vmatprep.subr.mxu0 0.0
        %1196 = vmatpush1.msra.mxu0 0.0
        %1197 = vmatprep.subr.mxu0 0.0
        %1198 = vmatpush1.msra.mxu0 0.0
        %1199 = vmatprep.subr.mxu0 0.0
        %1200 = vmatpush1.msra.mxu0 0.0
        %1201 = vmatprep.subr.mxu0 0.0
        %1202 = vmatpush1.msra.mxu0 0.0
        %1203 = vmatprep.subr.mxu0 0.0
        %1204 = vmatpush1.msra.mxu0 0.0
        %1205 = vmatprep.subr.mxu0 0.0
        %1206 = vmatpush1.msra.mxu0 0.0
        %1207 = vmatprep.subr.mxu0 0.0
        %1208 = vmatpush1.msra.mxu0 0.0
        %1209 = vmatprep.subr.mxu0 0.0
        %1210 = vmatpush1.msra.mxu0 0.0
        %1211 = vmatprep.subr.mxu0 0.0
        %1212 = vmatpush1.msra.mxu0 0.0
        %1213 = vmatprep.subr.mxu0 0.0
        %1214 = vmatpush1.msra.mxu0 0.0
        %1215 = vmatprep.subr.mxu0 0.0
        %1216 = vmatpush1.msra.mxu0 0.0
        %1217 = vmatprep.subr.mxu0 0.0
        %1218 = vmatpush1.msra.mxu0 0.0
        %1219 = vmatprep.subr.mxu0 0.0
        %1220 = vmatpush1.msra.mxu0 0.0
        %1221 = vmatprep.subr.mxu0 0.0
        %1222 = vmatpush1.msra.mxu0 0.0
        %1223 = vmatprep.subr.mxu0 0.0
        %1224 = vmatpush1.msra.mxu0 0.0
        %1225 = vmatprep.subr.mxu0 0.0
        %1226 = vmatpush1.msra.mxu0 0.0
        %1227 = vmatprep.subr.mxu0 0.0
        %1228 = vmatpush1.msra.mxu0 0.0
        %1229 = vmatprep.subr.mxu0 0.0
        %1230 = vmatpush1.msra.mxu0 0.0
        %1231 = vmatprep.subr.mxu0 0.0
        %1232 = vmatpush1.msra.mxu0 0.0
        %1233 = vmatprep.subr.mxu0 0.0
        %1234 = vmatpush1.msra.mxu0 0.0
        %1235 = vmatprep.subr.mxu0 0.0
        %1236 = vmatpush1.msra.mxu0 0.0
        %1237 = vmatprep.subr.mxu0 0.0
        %1238 = vmatpush1.msra.mxu0 0.0
        %1239 = vmatprep.subr.mxu0 0.0
        %1240 = vmatpush1.msra.mxu0 0.0
        %1241 = vmatprep.subr.mxu0 0.0
        %1242 = vmatpush1.msra.mxu0 0.0
        %1243 = vmatprep.subr.mxu0 0.0
        %1244 = vmatpush1.msra.mxu0 0.0
        %1245 = vmatprep.subr.mxu0 0.0
        %1246 = vmatpush1.msra.mxu0 0.0
        %1247 = vmatprep.subr.mxu0 0.0
        %1248 = vmatpush1.msra.mxu0 0.0
        %1249 = vmatprep.subr.mxu0 0.0
        %1250 = vmatpush1.msra.mxu0 0.0
        %1251 = vmatprep.subr.mxu0 0.0
        %1252 = vmatpush1.msra.mxu0 0.0
        %1253 = vmatprep.subr.mxu0 0.0
        %1254 = vmatpush1.msra.mxu0 0.0
        %1255 = vmatprep.mubr.f32.mxu0 0.0
        %1256 = vmatmul.mubr.f32.gmra.mrb[0].mxu0 %v1183
        %v1257 = vpop.f32.mrb[0].mxu0
        %v1258 = vadd.f32 0.0, %v1257
        %v1259 = vpop.f32.mrb[0].mxu0
        %1260 = vmatprep.mubr.f32.mxu0 0.0
        %1261 = vmatmul.mubr.f32.gmra.mrb[0].mxu0 %v1185
        %v1262 = vpop.f32.mrb[0].mxu0
        %v1263 = vadd.f32 0.0, %v1262
        %v1264 = vpop.f32.mrb[0].mxu0
        %1265 = vmatprep.mubr.f32.mxu0 0.0
        %1266 = vmatmul.mubr.f32.gmra.mrb[0].mxu0 %v1187
        %v1267 = vpop.f32.mrb[0].mxu0
        %v1268 = vadd.f32 0.0, %v1267
        %v1269 = vpop.f32.mrb[0].mxu0
        %1270 = vmatprep.mubr.f32.mxu0 0.0
        %1271 = vmatmul.mubr.f32.gmra.mrb[0].mxu0 %v1189
        %v1272 = vpop.f32.mrb[0].mxu0
        %v1273 = vadd.f32 0.0, %v1272
        %v1274 = vpop.f32.mrb[0].mxu0
        %1275 = vdwg.mxu0
        %v1276 = vmul.f32 %v1258, 0.125
        %v1277 = vmul.f32 %v1263, 0.125
        %v1278 = vmul.f32 %v1268, 0.125
        %v1279 = vmul.f32 %v1273, 0.125
        %v1280 = vmul.f32 %v196, %v1276
        %v1281 = vmul.f32 %v196, %v1277
        %v1282 = vmul.f32 %v196, %v1278
        %v1283 = vmul.f32 %v196, %v1279
        %v1284 = vadd.f32 %v1051, %v1280
        %v1285 = vadd.f32 %v1052, %v1281
        %v1286 = vadd.f32 %v1053, %v1282
        %v1287 = vadd.f32 %v1054, %v1283
        %v1289 = vsel %vm360, %v496, 0
        %v1292 = vsel %vm360, %v497, 0
        %1294 = vmatprep.subr.mxu0 0.0
        %1295 = vmatpush1.msra.mxu0 %v1284
        %1296 = vmatprep.subr.mxu0 0.0
        %1297 = vmatpush1.msra.mxu0 %v1285
        %1298 = vmatprep.subr.mxu0 0.0
        %1299 = vmatpush1.msra.mxu0 %v1286
        %1300 = vmatprep.subr.mxu0 0.0
        %1301 = vmatpush1.msra.mxu0 %v1287
        %1302 = vmatprep.subr.mxu0 0.0
        %1303 = vmatpush1.msra.mxu0 0.0
        %1304 = vmatprep.subr.mxu0 0.0
        %1305 = vmatpush1.msra.mxu0 0.0
        %1306 = vmatprep.subr.mxu0 0.0
        %1307 = vmatpush1.msra.mxu0 0.0
        %1308 = vmatprep.subr.mxu0 0.0
        %1309 = vmatpush1.msra.mxu0 0.0
        %1310 = vmatprep.subr.mxu0 0.0
        %1311 = vmatpush1.msra.mxu0 0.0
        %1312 = vmatprep.subr.mxu0 0.0
        %1313 = vmatpush1.msra.mxu0 0.0
        %1314 = vmatprep.subr.mxu0 0.0
        %1315 = vmatpush1.msra.mxu0 0.0
        %1316 = vmatprep.subr.mxu0 0.0
        %1317 = vmatpush1.msra.mxu0 0.0
        %1318 = vmatprep.subr.mxu0 0.0
        %1319 = vmatpush1.msra.mxu0 0.0
        %1320 = vmatprep.subr.mxu0 0.0
        %1321 = vmatpush1.msra.mxu0 0.0
        %1322 = vmatprep.subr.mxu0 0.0
        %1323 = vmatpush1.msra.mxu0 0.0
        %1324 = vmatprep.subr.mxu0 0.0
        %1325 = vmatpush1.msra.mxu0 0.0
        %1326 = vmatprep.subr.mxu0 0.0
        %1327 = vmatpush1.msra.mxu0 0.0
        %1328 = vmatprep.subr.mxu0 0.0
        %1329 = vmatpush1.msra.mxu0 0.0
        %1330 = vmatprep.subr.mxu0 0.0
        %1331 = vmatpush1.msra.mxu0 0.0
        %1332 = vmatprep.subr.mxu0 0.0
        %1333 = vmatpush1.msra.mxu0 0.0
        %1334 = vmatprep.subr.mxu0 0.0
        %1335 = vmatpush1.msra.mxu0 0.0
        %1336 = vmatprep.subr.mxu0 0.0
        %1337 = vmatpush1.msra.mxu0 0.0
        %1338 = vmatprep.subr.mxu0 0.0
        %1339 = vmatpush1.msra.mxu0 0.0
        %1340 = vmatprep.subr.mxu0 0.0
        %1341 = vmatpush1.msra.mxu0 0.0
        %1342 = vmatprep.subr.mxu0 0.0
        %1343 = vmatpush1.msra.mxu0 0.0
        %1344 = vmatprep.subr.mxu0 0.0
        %1345 = vmatpush1.msra.mxu0 0.0
        %1346 = vmatprep.subr.mxu0 0.0
        %1347 = vmatpush1.msra.mxu0 0.0
        %1348 = vmatprep.subr.mxu0 0.0
        %1349 = vmatpush1.msra.mxu0 0.0
        %1350 = vmatprep.subr.mxu0 0.0
        %1351 = vmatpush1.msra.mxu0 0.0
        %1352 = vmatprep.subr.mxu0 0.0
        %1353 = vmatpush1.msra.mxu0 0.0
        %1354 = vmatprep.subr.mxu0 0.0
        %1355 = vmatpush1.msra.mxu0 0.0
        %1356 = vmatprep.subr.mxu0 0.0
        %1357 = vmatpush1.msra.mxu0 0.0
        %1358 = vmatprep.mubr.f32.mxu0 0.0
        %1359 = vmatmul.mubr.f32.gmra.mrb[0].mxu0 %v1289
        %v1360 = vpop.f32.mrb[0].mxu0
        %v1361 = vadd.f32 %v585, %v1360
        %v1362 = vpop.f32.mrb[0].mxu0
        %1363 = vmatprep.mubr.f32.mxu0 0.0
        %1364 = vmatmul.mubr.f32.gmra.mrb[0].mxu0 %v1292
        %v1365 = vpop.f32.mrb[0].mxu0
        %v1366 = vadd.f32 %v585, %v1365
        %v1367 = vpop.f32.mrb[0].mxu0
        %1368 = vdwg.mxu0
        %v1369 = vmul.f32 %v1361, %v578
        %v1370 = vmul.f32 %v1366, %v579
        %v1371 = vsel %vm669, %v1369, 0.0
        %1372 = vadd.xlane.f32.xlu0 %v1371
        %v1373 = vpop.xlane.xlu0 %1372
        %v1374 = vsel %vm669, %v1370, 0.0
        %1375 = vadd.xlane.f32.xlu0 %v1374
        %v1376 = vpop.xlane.xlu0 %1375
        %v1377 = vsub.f32 %v1373, %v204
        %vm1378 = vcmp.lt.s32.totalorder %v581, 6
        %v1379 = vsel %vm1378, 1, 0
        %v1380 = vcvt.s32.f32 %v1379
        %v1381 = vmul.f32 %v1377, %v1380
        %v1382 = vmul.f32 %v1381, %v1381
        %1384 = vrot.lane.b32.xlu0 %v1382, 120
        %v1385 = vpop.permute.xlu0 %1384
        %v1387 = vsel %vm686, %v1385, 0.0
        %1388 = vadd.xlane.f32.xlu0 %v1387
        %v1389 = vpop.xlane.xlu0 %1388
        %v1390 = vrot.slane %v1389, 4
        %v1391 = vadd.f32 %v1389, %v1390
        %v1392 = vrot.slane %v1391, 2
        %v1393 = vadd.f32 %v1391, %v1392
        %v1394 = vrot.slane %v1393, 1
        %v1395 = vadd.f32 %v1393, %v1394
        %s1396 = vtos %v1395
        %v1397 = vstv %s1396
        %v1398 = vmul.f32 %v1397, 0.16666667
        %vm1399 = vcmask 24600
        %1400 = vst.msk [vmem:[%s163] sm:$0x1] %vm1399, %v1398
        %v1401 = vsub.f32 %v205, %v1376
        %1403 = vset.pattern.permute.xlu0 8
        %1404 = vperm.xlu0 %1403, %v1401
        %v1405 = vpop.permute.xlu0 %1404
        %v1407 = vmul.f32 %v1405, %v579
        %1408 = vrot.lane.b32.xlu0 %v514, 72
        %v1409 = vpop.permute.xlu0 %1408
        %1410 = vrot.lane.b32.xlu0 %v515, 72
        %v1411 = vpop.permute.xlu0 %1410
        %1412 = vrot.lane.b32.xlu0 %v516, 72
        %v1413 = vpop.permute.xlu0 %1412
        %1414 = vrot.lane.b32.xlu0 %v517, 72
        %v1415 = vpop.permute.xlu0 %1414
        %v1416 = vsel %vm218, %v1409, 0
        %v1418 = vsel %vm218, %v1411, 0
        %v1420 = vsel %vm218, %v1413, 0
        %v1422 = vsel %vm218, %v1415, 0
        %1424 = vmatprep.subr.mxu0 0.0
        %1425 = vmatpush1.msra.mxu0 %v1407
        %1426 = vmatprep.subr.mxu0 0.0
        %1427 = vmatpush1.msra.mxu0 0.0
        %1428 = vmatprep.subr.mxu0 0.0
        %1429 = vmatpush1.msra.mxu0 0.0
        %1430 = vmatprep.subr.mxu0 0.0
        %1431 = vmatpush1.msra.mxu0 0.0
        %1432 = vmatprep.subr.mxu0 0.0
        %1433 = vmatpush1.msra.mxu0 0.0
        %1434 = vmatprep.subr.mxu0 0.0
        %1435 = vmatpush1.msra.mxu0 0.0
        %1436 = vmatprep.subr.mxu0 0.0
        %1437 = vmatpush1.msra.mxu0 0.0
        %1438 = vmatprep.subr.mxu0 0.0
        %1439 = vmatpush1.msra.mxu0 0.0
        %1440 = vmatprep.subr.mxu0 0.0
        %1441 = vmatpush1.msra.mxu0 0.0
        %1442 = vmatprep.subr.mxu0 0.0
        %1443 = vmatpush1.msra.mxu0 0.0
        %1444 = vmatprep.subr.mxu0 0.0
        %1445 = vmatpush1.msra.mxu0 0.0
        %1446 = vmatprep.subr.mxu0 0.0
        %1447 = vmatpush1.msra.mxu0 0.0
        %1448 = vmatprep.subr.mxu0 0.0
        %1449 = vmatpush1.msra.mxu0 0.0
        %1450 = vmatprep.subr.mxu0 0.0
        %1451 = vmatpush1.msra.mxu0 0.0
        %1452 = vmatprep.subr.mxu0 0.0
        %1453 = vmatpush1.msra.mxu0 0.0
        %1454 = vmatprep.subr.mxu0 0.0
        %1455 = vmatpush1.msra.mxu0 0.0
        %1456 = vmatprep.subr.mxu0 0.0
        %1457 = vmatpush1.msra.mxu0 0.0
        %1458 = vmatprep.subr.mxu0 0.0
        %1459 = vmatpush1.msra.mxu0 0.0
        %1460 = vmatprep.subr.mxu0 0.0
        %1461 = vmatpush1.msra.mxu0 0.0
        %1462 = vmatprep.subr.mxu0 0.0
        %1463 = vmatpush1.msra.mxu0 0.0
        %1464 = vmatprep.subr.mxu0 0.0
        %1465 = vmatpush1.msra.mxu0 0.0
        %1466 = vmatprep.subr.mxu0 0.0
        %1467 = vmatpush1.msra.mxu0 0.0
        %1468 = vmatprep.subr.mxu0 0.0
        %1469 = vmatpush1.msra.mxu0 0.0
        %1470 = vmatprep.subr.mxu0 0.0
        %1471 = vmatpush1.msra.mxu0 0.0
        %1472 = vmatprep.subr.mxu0 0.0
        %1473 = vmatpush1.msra.mxu0 0.0
        %1474 = vmatprep.subr.mxu0 0.0
        %1475 = vmatpush1.msra.mxu0 0.0
        %1476 = vmatprep.subr.mxu0 0.0
        %1477 = vmatpush1.msra.mxu0 0.0
        %1478 = vmatprep.subr.mxu0 0.0
        %1479 = vmatpush1.msra.mxu0 0.0
        %1480 = vmatprep.subr.mxu0 0.0
        %1481 = vmatpush1.msra.mxu0 0.0
        %1482 = vmatprep.subr.mxu0 0.0
        %1483 = vmatpush1.msra.mxu0 0.0
        %1484 = vmatprep.subr.mxu0 0.0
        %1485 = vmatpush1.msra.mxu0 0.0
        %1486 = vmatprep.subr.mxu0 0.0
        %1487 = vmatpush1.msra.mxu0 0.0
        %1488 = vmatprep.mubr.f32.mxu0 0.0
        %1489 = vmatmul.mubr.f32.gmra.mrb[0].mxu0 %v1416
        %v1490 = vpop.f32.mrb[0].mxu0
        %v1491 = vadd.f32 0.0, %v1490
        %v1492 = vpop.f32.mrb[0].mxu0
        %1493 = vmatprep.mubr.f32.mxu0 0.0
        %1494 = vmatmul.mubr.f32.gmra.mrb[0].mxu0 %v1418
        %v1495 = vpop.f32.mrb[0].mxu0
        %v1496 = vadd.f32 0.0, %v1495
        %v1497 = vpop.f32.mrb[0].mxu0
        %1498 = vmatprep.mubr.f32.mxu0 0.0
        %1499 = vmatmul.mubr.f32.gmra.mrb[0].mxu0 %v1420
        %v1500 = vpop.f32.mrb[0].mxu0
        %v1501 = vadd.f32 0.0, %v1500
        %v1502 = vpop.f32.mrb[0].mxu0
        %1503 = vmatprep.mubr.f32.mxu0 0.0
        %1504 = vmatmul.mubr.f32.gmra.mrb[0].mxu0 %v1422
        %v1505 = vpop.f32.mrb[0].mxu0
        %v1506 = vadd.f32 0.0, %v1505
        %v1507 = vpop.f32.mrb[0].mxu0
        %1508 = vdwg.mxu0
        %v1509 = vmul.f32 %v1491, 0.125
        %v1510 = vmul.f32 %v1496, 0.125
        %v1511 = vmul.f32 %v1501, 0.125
        %v1512 = vmul.f32 %v1506, 0.125
        %v1513 = vmul.f32 %v196, %v1509
        %v1514 = vmul.f32 %v196, %v1510
        %v1515 = vmul.f32 %v196, %v1511
        %v1516 = vmul.f32 %v196, %v1512
        %v1517 = vadd.f32 %v1284, %v1513
        %v1518 = vadd.f32 %v1285, %v1514
        %v1519 = vadd.f32 %v1286, %v1515
        %v1520 = vadd.f32 %v1287, %v1516
        %1521 = vmatprep.subr.mxu0 0.0
        %1522 = vmatpush1.msra.mxu0 %v1517
        %1523 = vmatprep.subr.mxu0 0.0
        %1524 = vmatpush1.msra.mxu0 %v1518
        %1525 = vmatprep.subr.mxu0 0.0
        %1526 = vmatpush1.msra.mxu0 %v1519
        %1527 = vmatprep.subr.mxu0 0.0
        %1528 = vmatpush1.msra.mxu0 %v1520
        %1529 = vmatprep.subr.mxu0 0.0
        %1530 = vmatpush1.msra.mxu0 0.0
        %1531 = vmatprep.subr.mxu0 0.0
        %1532 = vmatpush1.msra.mxu0 0.0
        %1533 = vmatprep.subr.mxu0 0.0
        %1534 = vmatpush1.msra.mxu0 0.0
        %1535 = vmatprep.subr.mxu0 0.0
        %1536 = vmatpush1.msra.mxu0 0.0
        %1537 = vmatprep.subr.mxu0 0.0
        %1538 = vmatpush1.msra.mxu0 0.0
        %1539 = vmatprep.subr.mxu0 0.0
        %1540 = vmatpush1.msra.mxu0 0.0
        %1541 = vmatprep.subr.mxu0 0.0
        %1542 = vmatpush1.msra.mxu0 0.0
        %1543 = vmatprep.subr.mxu0 0.0
        %1544 = vmatpush1.msra.mxu0 0.0
        %1545 = vmatprep.subr.mxu0 0.0
        %1546 = vmatpush1.msra.mxu0 0.0
        %1547 = vmatprep.subr.mxu0 0.0
        %1548 = vmatpush1.msra.mxu0 0.0
        %1549 = vmatprep.subr.mxu0 0.0
        %1550 = vmatpush1.msra.mxu0 0.0
        %1551 = vmatprep.subr.mxu0 0.0
        %1552 = vmatpush1.msra.mxu0 0.0
        %1553 = vmatprep.subr.mxu0 0.0
        %1554 = vmatpush1.msra.mxu0 0.0
        %1555 = vmatprep.subr.mxu0 0.0
        %1556 = vmatpush1.msra.mxu0 0.0
        %1557 = vmatprep.subr.mxu0 0.0
        %1558 = vmatpush1.msra.mxu0 0.0
        %1559 = vmatprep.subr.mxu0 0.0
        %1560 = vmatpush1.msra.mxu0 0.0
        %1561 = vmatprep.subr.mxu0 0.0
        %1562 = vmatpush1.msra.mxu0 0.0
        %1563 = vmatprep.subr.mxu0 0.0
        %1564 = vmatpush1.msra.mxu0 0.0
        %1565 = vmatprep.subr.mxu0 0.0
        %1566 = vmatpush1.msra.mxu0 0.0
        %1567 = vmatprep.subr.mxu0 0.0
        %1568 = vmatpush1.msra.mxu0 0.0
        %1569 = vmatprep.subr.mxu0 0.0
        %1570 = vmatpush1.msra.mxu0 0.0
        %1571 = vmatprep.subr.mxu0 0.0
        %1572 = vmatpush1.msra.mxu0 0.0
        %1573 = vmatprep.subr.mxu0 0.0
        %1574 = vmatpush1.msra.mxu0 0.0
        %1575 = vmatprep.subr.mxu0 0.0
        %1576 = vmatpush1.msra.mxu0 0.0
        %1577 = vmatprep.subr.mxu0 0.0
        %1578 = vmatpush1.msra.mxu0 0.0
        %1579 = vmatprep.subr.mxu0 0.0
        %1580 = vmatpush1.msra.mxu0 0.0
        %1581 = vmatprep.subr.mxu0 0.0
        %1582 = vmatpush1.msra.mxu0 0.0
        %1583 = vmatprep.subr.mxu0 0.0
        %1584 = vmatpush1.msra.mxu0 0.0
        %1585 = vmatprep.mubr.f32.mxu0 0.0
        %1586 = vmatmul.mubr.f32.gmra.mrb[0].mxu0 %v587
        %v1587 = vpop.f32.mrb[0].mxu0
        %v1588 = vadd.f32 %v585, %v1587
        %v1589 = vpop.f32.mrb[0].mxu0
        %1590 = vdwg.mxu0
        %v1591 = vmul.f32 %v1588, %v572
        %v1592 = vsel %vm669, %v1591, 0.0
        %1593 = vadd.xlane.f32.xlu0 %v1592
        %v1594 = vpop.xlane.xlu0 %1593
        %v1595 = vsub.f32 %v1594, %v198
        %v1596 = vmul.f32 %v1595, %v679
        %v1597 = vmul.f32 %v1596, %v1596
        %1599 = vrot.lane.b32.xlu0 %v1597, 120
        %v1600 = vpop.permute.xlu0 %1599
        %v1602 = vsel %vm686, %v1600, 0.0
        %1603 = vadd.xlane.f32.xlu0 %v1602
        %v1604 = vpop.xlane.xlu0 %1603
        %v1605 = vrot.slane %v1604, 4
        %v1606 = vadd.f32 %v1604, %v1605
        %v1607 = vrot.slane %v1606, 2
        %v1608 = vadd.f32 %v1606, %v1607
        %v1609 = vrot.slane %v1608, 1
        %v1610 = vadd.f32 %v1608, %v1609
        %s1611 = vtos %v1610
        %v1612 = vstv %s1611
        %v1613 = vmul.f32 %v1612, 0.125
        %vm1614 = vcmask 32800
        %1615 = vst.msk [vmem:[%s163] sm:$0x1] %vm1614, %v1613
        %1616 = vst.msk [vmem:[%s180] sm:$0xff] %vm669, %v1517
        %1617 = vst.msk [vmem:[%s180 + $0x8] sm:$0xff] %vm669, %v1518
        %1618 = vst.msk [vmem:[%s180 + $0x10] sm:$0xff] %vm669, %v1519
        %1619 = vst.msk [vmem:[%s180 + $0x18] sm:$0xff] %vm669, %v1520
        %s1620 = sand.u32 %s73, 1
        %s1621 = scalar_lea.sflag [#allocation3], %s1620
        %s1622 = sand.u32 %s73, 1
        %s1623 = scalar_lea.vmem [#allocation2], %s1622
        %p1624 = scmp.lt.s32.totalorder %s18, 3
        %s1625 = scalar_select %p1624, %s18, 3
        %s1626 = smul.addr %s1625, 4
        %s1627 = smul.addr %s1626, 8
        %s1628 = scalar_lea.vmem %s3, %s1627
        // Predicated region
        $region29: #{meta_forward_batch.1} parent=27 // pred_check
          %p1629 = pneg %p83
        $region30: #{meta_forward_batch.1} parent=27 // pred_check_branch
          %1631 = sbr.rel (%p1629) target = $region32
        $region31: #{meta_forward_batch.1} parent=27 // pred_region
          %s1633 = ssub.s32 16, 16
          %1634 = vsyncadd %s1621, %s1633
          %s1635 = smul.addr %s18, 16
          %s1636 = scalar_lea.hbm %s2, %s1635
          %s1638 = sshll.u32 %s1623, 4
          %s1639 = int_to_ptr.vmem [resolvable:$true] %s1638
          %1641 = dma.vmem_to_hbm [thread:$0]  %s1639, 16, %s1636, %s1621
        $region32: #{meta_forward_batch.1} parent=27 // pred_fallthru
          _
        // Predicated region
        $region33: #{meta_forward_batch.1} parent=27 // pred_check
          %p1642 = pneg %p109
        $region34: #{meta_forward_batch.1} parent=27 // pred_check_branch
          %1644 = sbr.rel (%p1642) target = $region36
        $region35: #{meta_forward_batch.1} parent=27 // pred_region
          _
        $region36: #{meta_forward_batch.1} parent=27 // pred_fallthru
          _
      $region28: #{meta_forward_batch.1} parent=5 // pred_fallthru
        _
      %p1645 = scmp.le.s32.totalorder 2, %s13
      // Predicated region
      $region37: #{meta_forward_batch.1} parent=5 // pred_check
        %p1646 = pneg %p1645
      $region38: #{meta_forward_batch.1} parent=5 // pred_check_branch
        %1648 = sbr.rel (%p1646) target = $region40
      $region39: #{meta_forward_batch.1} parent=5 // pred_region
        %s1649 = ssub.s32 %s13, 2
        // Predicated region
        $region41: #{meta_forward_batch.1} parent=39 // pred_check
          %p1650 = pneg %p89
        $region42: #{meta_forward_batch.1} parent=39 // pred_check_branch
          %1652 = sbr.rel (%p1650) target = $region44
        $region43: #{meta_forward_batch.1} parent=39 // pred_region
          %s1653 = sand.u32 %s74, 1
          %s1654 = scalar_lea.sflag [#allocation3], %s1653
          %s1655 = sand.u32 %s74, 1
          %s1656 = scalar_lea.vmem [#allocation2], %s1655
          %1657 = dma.done %s1654, 16
        $region44: #{meta_forward_batch.1} parent=39 // pred_fallthru
          _
        // Predicated region
        $region45: #{meta_forward_batch.1} parent=39 // pred_check
          %p1658 = pneg %p115
        $region46: #{meta_forward_batch.1} parent=39 // pred_check_branch
          %1660 = sbr.rel (%p1658) target = $region48
        $region47: #{meta_forward_batch.1} parent=39 // pred_region
          %p1661 = scmp.lt.s32.totalorder %s19, 3
          %s1662 = scalar_select %p1661, %s19, 3
          %s1663 = smul.addr %s1662, 4
          %s1664 = smul.addr %s1663, 8
          %s1665 = scalar_lea.vmem %s3, %s1664
        $region48: #{meta_forward_batch.1} parent=39 // pred_fallthru
          _
      $region40: #{meta_forward_batch.1} parent=5 // pred_fallthru
        _
    $region6: #{meta_forward_batch.1} parent=1 // loop_footer
      %s17 = sadd.s32 1, %s13
    $region7: #{meta_forward_batch.1} parent=1 // loop_footer_branch
      %12 = sbr.rel target = $region3
    $region8: #{meta_forward_batch.1} parent=1 // loop_exit
      _
    %1666 = vsyncpa [#allocation3], 1
    %s1667 = scalar_lea.sflag [#allocation3], 1
    %1668 = vsyncpa %s1667, 1

</llo_original>
